<compile_context>
chip_gen: v6e
topology: v6e:2x2x1
jax: 0.10.0
libtpu: 0.0.40
codegen_flags: <defaults>
</compile_context>

<pallas_src>
import functools

import jax
import jax.numpy as jnp
from jax.experimental import pallas as pl
from jax.experimental.pallas import tpu as pltpu


def _cdiv(a, b):
    return -(-a // b)


def _round_up(x, m):
    return _cdiv(x, m) * m


def _gelu_tanh(x):
    # PyTorch nn.functional.gelu(x, approximate='tanh'), computed in f32.
    c = 0.7978845608028654  # sqrt(2/pi)
    return 0.5 * x * (1.0 + jnp.tanh(c * (x + 0.044715 * x * x * x)))


def _choose_ti(I, max_ti):
    """Pick ti (multiple of 128, <= max_ti) minimizing padded Ip; prefer large ti."""
    max_ti = max(128, (max_ti // 128) * 128)
    best_ti, best_ip = 128, _round_up(I, 128)
    for ti in range(128, max_ti + 1, 128):
        ip = _round_up(I, ti)
        if ip < best_ip or (ip == best_ip and ti > best_ti):
            best_ti, best_ip = ti, ip
    return best_ti, best_ip


def _choose_tm(M, pref_tm):
    """Pick a row tile: as large as possible (<= pref_tm), even tile count for
    v7x megacore balance, multiple of 128."""
    Mp = _round_up(max(M, 1), 128)
    if Mp <= 128:
        return 128
    n = max(2, 2 * _cdiv(Mp, 2 * pref_tm))  # even number of row tiles
    return _round_up(_cdiv(Mp, n), 128)


def _vmem_bytes(tm, ti, H, Ip, act_bytes, w_bytes):
    """Double-buffered working-set estimate for the pallas_call."""
    total = 2 * tm * H * act_bytes          # x row tile (double-buffered)
    total += 2 * tm * H * act_bytes         # output tile (double-buffered)
    total += 2 * H * ti * w_bytes           # w1 I-chunk (double-buffered)
    total += 2 * ti * H * w_bytes           # w2 I-chunk (double-buffered)
    total += Ip * w_bytes + H * w_bytes     # resident biases
    total += tm * H * 4                     # f32 accumulator scratch
    return total


def _siglip_mlp_kernel(x_ref, w1_ref, b1_ref, w2_ref, b2_ref, o_ref, acc_ref):
    # x_ref : (tm, H)    row tile of flattened hidden_states (native dtype)
    # w1_ref: (H, ti)    fc1 weight, I-chunk k
    # b1_ref: (n_k, ti)  fc1 bias, fully resident; row k is this step's chunk
    # w2_ref: (ti, H)    fc2 weight, I-chunk k
    # b2_ref: (1, H)     fc2 bias, resident
    # o_ref : (tm, H)
    # acc_ref: (tm, H) f32 accumulator, persistent across the k (I) axis.
    k = pl.program_id(1)

    @pl.when(k == 0)
    def _():
        # Fold the fc2 bias into the accumulator init (once per row tile).
        acc_ref[...] = jnp.broadcast_to(
            b2_ref[...], acc_ref.shape).astype(jnp.float32)

    # fc1 chunk: native-dtype operands, f32 accumulation on the MXU.
    h = jnp.dot(x_ref[...], w1_ref[...], preferred_element_type=jnp.float32)
    h = h + b1_ref[pl.ds(k, 1), :].astype(jnp.float32)
    h = _gelu_tanh(h)

    # fc2 chunk: cast the activation back to the weight dtype for the fast MXU path.
    acc_ref[...] += jnp.dot(h.astype(w2_ref.dtype), w2_ref[...],
                            preferred_element_type=jnp.float32)

    @pl.when(k == pl.num_programs(1) - 1)
    def _():
        o_ref[...] = acc_ref[...].astype(o_ref.dtype)


def prepare_siglip_mlp_params(w1, b1, w2, b2, *, max_ti=2176, pref_tm=512,
                              vmem_budget_bytes=40 * 1024 * 1024):
    """Pad / arrange MLP weights ONCE at model init (not per forward call).

    w1: [H, I], b1: [I], w2: [I, H], b2: [H] (pre-transposed vs. nn.Linear).
    """
    H, I = w1.shape
    assert w2.shape == (I, H) and b1.shape == (I,) and b2.shape == (H,)
    w_bytes = jnp.dtype(w1.dtype).itemsize

    ti, Ip = _choose_ti(I, max_ti)
    # Shrink ti until the (double-buffered) working set fits the VMEM budget
    # (conservative vs. v7x's 64 MiB physical VMEM).
    while ti > 128 and _vmem_bytes(pref_tm, ti, H, Ip, w_bytes, w_bytes) > vmem_budget_bytes:
        ti, Ip = _choose_ti(I, ti - 128)

    w1p = w1 if Ip == I else jnp.pad(w1, ((0, 0), (0, Ip - I)))
    b1p = b1 if Ip == I else jnp.pad(b1, ((0, Ip - I),))
    w2p = w2 if Ip == I else jnp.pad(w2, ((0, Ip - I), (0, 0)))
    return {
        "w1": w1p,                    # [H, Ip]
        "b1": b1p,                    # [Ip]
        "w2": w2p,                    # [Ip, H]
        "b2": b2.reshape(1, H),       # [1, H]
        "ti": int(ti),
        "pref_tm": int(pref_tm),
    }


@functools.partial(jax.jit, static_argnames=("tm", "ti"))
def _siglip_mlp_call(hidden_states, w1p, b1p, w2p, b2p, *, tm, ti):
    B, S, H = hidden_states.shape
    Ip = w1p.shape[1]
    M = B * S
    n_m = _cdiv(M, tm)
    Mp = n_m * tm
    n_k = Ip // ti

    x2d = hidden_states.reshape(M, H)
    if Mp != M:
        x2d = jnp.pad(x2d, ((0, Mp - M), (0, 0)))
    b1_2d = b1p.reshape(n_k, ti)

    act_b = jnp.dtype(hidden_states.dtype).itemsize
    w_b = jnp.dtype(w1p.dtype).itemsize
    est = _vmem_bytes(tm, ti, H, Ip, act_b, w_b)
    vmem_limit = min(64 * 1024 * 1024,
                     max(32 * 1024 * 1024, int(est * 1.25) + 2 * 1024 * 1024))

    cost = pl.CostEstimate(
        flops=4 * Mp * H * Ip,
        transcendentals=Mp * Ip,
        bytes_accessed=(2 * Mp * H * act_b                 # x in + out
                        + n_m * 2 * H * Ip * w_b           # weights re-streamed per row tile
                        + Ip * w_b + H * w_b),             # biases
    )

    out = pl.pallas_call(
        _siglip_mlp_kernel,
        out_shape=jax.ShapeDtypeStruct((Mp, H), hidden_states.dtype),
        grid_spec=pltpu.PrefetchScalarGridSpec(
            num_scalar_prefetch=0,
            grid=(n_m, n_k),
            in_specs=[
                pl.BlockSpec((tm, H), lambda i, k: (i, 0)),    # x row tile
                pl.BlockSpec((H, ti), lambda i, k: (0, k)),    # w1 I-chunk
                pl.BlockSpec((n_k, ti), lambda i, k: (0, 0)),  # b1, resident
                pl.BlockSpec((ti, H), lambda i, k: (k, 0)),    # w2 I-chunk
                pl.BlockSpec((1, H), lambda i, k: (0, 0)),     # b2, resident
            ],
            out_specs=pl.BlockSpec((tm, H), lambda i, k: (i, 0)),
            scratch_shapes=[pltpu.VMEM((tm, H), jnp.float32)],
        ),
        compiler_params=pltpu.CompilerParams(
            dimension_semantics=("parallel", "arbitrary"),
            vmem_limit_bytes=vmem_limit),
        cost_estimate=cost,
    )(x2d, w1p, b1_2d, w2p, b2p)

    if Mp != M:
        out = out[:M]
    return out.reshape(B, S, H)


def siglip_mlp(hidden_states, params):
    """hidden_states: [B, S, H]; params from prepare_siglip_mlp_params()."""
    B, S, _ = hidden_states.shape
    tm = _choose_tm(B * S, params["pref_tm"])
    return _siglip_mlp_call(hidden_states, params["w1"], params["b1"],
                            params["w2"], params["b2"],
                            tm=tm, ti=params["ti"])


def _reference(hidden_states, w1, b1, w2, b2):
    x = hidden_states.astype(jnp.float32)
    h = x @ w1.astype(jnp.float32) + b1.astype(jnp.float32)
    h = _gelu_tanh(h)
    o = h @ w2.astype(jnp.float32) + b2.astype(jnp.float32)
    return o.astype(hidden_states.dtype)


if __name__ == "__main__":
    key = jax.random.PRNGKey(0)
    ks = jax.random.split(key, 10)

    # ---- Case 1: f32, small Siglip-like shapes. max_ti=256 forces n_k=2 to
    # exercise the k-accumulation loop; M=392 exercises the padded-row tail.
    B, S, H, I = 2, 196, 128, 512
    x = jax.random.normal(ks[0], (B, S, H), dtype=jnp.float32)
    w1 = jax.random.normal(ks[1], (H, I), dtype=jnp.float32) * 0.02
    b1 = jax.random.normal(ks[2], (I,), dtype=jnp.float32) * 0.02
    w2 = jax.random.normal(ks[3], (I, H), dtype=jnp.float32) * 0.02
    b2 = jax.random.normal(ks[4], (H,), dtype=jnp.float32) * 0.02

    params = prepare_siglip_mlp_params(w1, b1, w2, b2, max_ti=256)
    out = jax.block_until_ready(siglip_mlp(x, params))
    ref = _reference(x, w1, b1, w2, b2)
    assert out.shape == (B, S, H)
    assert jnp.allclose(out, ref, atol=1e-4, rtol=1e-4), "f32 mismatch vs reference"

    # ---- Case 2: bf16 weights/activations, intermediate dim not a multiple of
    # 128 (576 -> Ip=640) to exercise the I-padding path and the bf16 MXU path.
    B2, S2, H2, I2 = 1, 196, 256, 576
    xb = jax.random.normal(ks[5], (B2, S2, H2), dtype=jnp.float32).astype(jnp.bfloat16)
    w1b = (jax.random.normal(ks[6], (H2, I2), dtype=jnp.float32) * 0.02).astype(jnp.bfloat16)
    b1b = (jax.random.normal(ks[7], (I2,), dtype=jnp.float32) * 0.02).astype(jnp.bfloat16)
    w2b = (jax.random.normal(ks[8], (I2, H2), dtype=jnp.float32) * 0.02).astype(jnp.bfloat16)
    b2b = (jax.random.normal(ks[9], (H2,), dtype=jnp.float32) * 0.02).astype(jnp.bfloat16)

    params_b = prepare_siglip_mlp_params(w1b, b1b, w2b, b2b)
    out_b = jax.block_until_ready(siglip_mlp(xb, params_b))
    ref_b = _reference(xb, w1b, b1b, w2b, b2b)
    assert out_b.shape == (B2, S2, H2)
    assert jnp.allclose(out_b.astype(jnp.float32), ref_b.astype(jnp.float32),
                        atol=2e-2, rtol=2e-2), "bf16 mismatch vs reference"

    print("KERNEL_OK")
</pallas_src>

<mosaic_0001>
module attributes {stable_mosaic.version = 11 : i64} {
  func.func @_siglip_mlp_kernel(%arg0: i32, %arg1: i32, %arg2: memref<256x128xf32, #tpu.memory_space<vmem>>, %arg3: memref<128x256xf32, #tpu.memory_space<vmem>>, %arg4: memref<2x256xf32, #tpu.memory_space<vmem>>, %arg5: memref<256x128xf32, #tpu.memory_space<vmem>>, %arg6: memref<1x128xf32, #tpu.memory_space<vmem>>, %arg7: memref<256x128xf32, #tpu.memory_space<vmem>>, %arg8: memref<256x128xf32, #tpu.memory_space<vmem>>) attributes {dimension_semantics = [#tpu.dimension_semantics<parallel>, #tpu.dimension_semantics<arbitrary>], iteration_bounds = array<i64: 2, 2>, scalar_prefetch = 0 : i64, scratch_operands = 1 : i64, tpu.core_type = #tpu.core_type<tc>, window_params = [{transform_indices = @transform_0, window_bounds = array<i64: 256, 128>}, {transform_indices = @transform_1, window_bounds = array<i64: 128, 256>}, {pipeline_mode = #tpu.pipeline_mode<synchronous>, transform_indices = @transform_2, window_bounds = array<i64: 2, 256>}, {transform_indices = @transform_3, window_bounds = array<i64: 256, 128>}, {pipeline_mode = #tpu.pipeline_mode<synchronous>, transform_indices = @transform_4, window_bounds = array<i64: 1, 128>}, {transform_indices = @transform_5, window_bounds = array<i64: 256, 128>}]} {
    %c0_i32 = arith.constant 0 : i32
    %0 = arith.cmpi eq, %arg1, %c0_i32 : i32
    %1 = arith.extui %0 : i1 to i32
    %c0_i32_0 = arith.constant 0 : i32
    %2 = arith.cmpi ne, %1, %c0_i32_0 : i32
    scf.if %2 {
      %c0_17 = arith.constant 0 : index
      %c0_18 = arith.constant 0 : index
      %31 = vector.load %arg6[%c0_17, %c0_18] : memref<1x128xf32, #tpu.memory_space<vmem>>, vector<1x128xf32>
      %32 = vector.shape_cast %31 : vector<1x128xf32> to vector<1x128xf32>
      %33 = vector.broadcast %32 : vector<1x128xf32> to vector<256x128xf32>
      %c0_19 = arith.constant 0 : index
      %c0_20 = arith.constant 0 : index
      %34 = vector.load %arg8[%c0_19, %c0_20] : memref<256x128xf32, #tpu.memory_space<vmem>>, vector<256x128xf32>
      tpu.vector_store %arg8[%c0_19, %c0_20], %33 {strides = array<i32>} : memref<256x128xf32, #tpu.memory_space<vmem>>, vector<256x128xf32>,
    } else {
    }
    %c0 = arith.constant 0 : index
    %c0_1 = arith.constant 0 : index
    %3 = vector.load %arg2[%c0, %c0_1] : memref<256x128xf32, #tpu.memory_space<vmem>>, vector<256x128xf32>
    %c0_2 = arith.constant 0 : index
    %c0_3 = arith.constant 0 : index
    %4 = vector.load %arg3[%c0_2, %c0_3] : memref<128x256xf32, #tpu.memory_space<vmem>>, vector<128x256xf32>
    %cst = arith.constant dense<0.000000e+00> : vector<256x256xf32>
    %5 = tpu.matmul %3, %4, %cst {dimension_numbers = #tpu.dot_dimension_numbers<[1], [0], [0], [1], [0, 0, 1, 1], [], []>} : vector<256x128xf32>, vector<128x256xf32>, vector<256x256xf32> -> vector<256x256xf32>
    %6 = arith.index_cast %arg1 : i32 to index
    %c0_4 = arith.constant 0 : index
    %7 = vector.load %arg4[%6, %c0_4] : memref<2x256xf32, #tpu.memory_space<vmem>>, vector<1x256xf32>
    %8 = vector.broadcast %7 : vector<1x256xf32> to vector<256x256xf32>
    %9 = arith.addf %5, %8 : vector<256x256xf32>
    %cst_5 = arith.constant 5.000000e-01 : f32
    %10 = vector.broadcast %cst_5 : f32 to vector<256x256xf32>
    %11 = arith.mulf %10, %9 : vector<256x256xf32>
    %cst_6 = arith.constant 4.471500e-02 : f32
    %12 = vector.broadcast %cst_6 : f32 to vector<256x256xf32>
    %13 = arith.mulf %12, %9 : vector<256x256xf32>
    %14 = arith.mulf %13, %9 : vector<256x256xf32>
    %15 = arith.mulf %14, %9 : vector<256x256xf32>
    %16 = arith.addf %9, %15 : vector<256x256xf32>
    %cst_7 = arith.constant 0.797884583 : f32
    %17 = vector.broadcast %cst_7 : f32 to vector<256x256xf32>
    %18 = arith.mulf %17, %16 : vector<256x256xf32>
    %19 = math.tanh %18 : vector<256x256xf32>
    %cst_8 = arith.constant 1.000000e+00 : f32
    %20 = vector.broadcast %cst_8 : f32 to vector<256x256xf32>
    %21 = arith.addf %20, %19 : vector<256x256xf32>
    %22 = arith.mulf %11, %21 : vector<256x256xf32>
    %c0_9 = arith.constant 0 : index
    %c0_10 = arith.constant 0 : index
    %23 = vector.load %arg8[%c0_9, %c0_10] : memref<256x128xf32, #tpu.memory_space<vmem>>, vector<256x128xf32>
    %c0_11 = arith.constant 0 : index
    %c0_12 = arith.constant 0 : index
    %24 = vector.load %arg5[%c0_11, %c0_12] : memref<256x128xf32, #tpu.memory_space<vmem>>, vector<256x128xf32>
    %cst_13 = arith.constant dense<0.000000e+00> : vector<256x128xf32>
    %25 = tpu.matmul %22, %24, %cst_13 {dimension_numbers = #tpu.dot_dimension_numbers<[1], [0], [0], [1], [0, 0, 1, 1], [], []>} : vector<256x256xf32>, vector<256x128xf32>, vector<256x128xf32> -> vector<256x128xf32>
    %26 = arith.addf %23, %25 : vector<256x128xf32>
    %c0_14 = arith.constant 0 : index
    %c0_15 = arith.constant 0 : index
    %27 = vector.load %arg8[%c0_14, %c0_15] : memref<256x128xf32, #tpu.memory_space<vmem>>, vector<256x128xf32>
    tpu.vector_store %arg8[%c0_14, %c0_15], %26 {strides = array<i32>} : memref<256x128xf32, #tpu.memory_space<vmem>>, vector<256x128xf32>,
    %c1_i32 = arith.constant 1 : i32
    %28 = arith.cmpi eq, %arg1, %c1_i32 : i32
    %29 = arith.extui %28 : i1 to i32
    %c0_i32_16 = arith.constant 0 : i32
    %30 = arith.cmpi ne, %29, %c0_i32_16 : i32
    scf.if %30 {
      %c0_17 = arith.constant 0 : index
      %c0_18 = arith.constant 0 : index
      %31 = vector.load %arg8[%c0_17, %c0_18] : memref<256x128xf32, #tpu.memory_space<vmem>>, vector<256x128xf32>
      %c0_19 = arith.constant 0 : index
      %c0_20 = arith.constant 0 : index
      %32 = vector.load %arg7[%c0_19, %c0_20] : memref<256x128xf32, #tpu.memory_space<vmem>>, vector<256x128xf32>
      tpu.vector_store %arg7[%c0_19, %c0_20], %31 {strides = array<i32>} : memref<256x128xf32, #tpu.memory_space<vmem>>, vector<256x128xf32>,
    } else {
    }
    return
  }
  func.func @transform_0(%arg0: i32, %arg1: i32) -> (i32, i32) {
    %c0_i32 = arith.constant 0 : i32
    %c0_i32_0 = arith.constant 0 : i32
    return %arg0, %c0_i32 : i32, i32
  }
  func.func @transform_1(%arg0: i32, %arg1: i32) -> (i32, i32) {
    %c0_i32 = arith.constant 0 : i32
    %c0_i32_0 = arith.constant 0 : i32
    return %c0_i32, %arg1 : i32, i32
  }
  func.func @transform_2(%arg0: i32, %arg1: i32) -> (i32, i32) {
    %c0_i32 = arith.constant 0 : i32
    %c0_i32_0 = arith.constant 0 : i32
    %c0_i32_1 = arith.constant 0 : i32
    return %c0_i32, %c0_i32_0 : i32, i32
  }
  func.func @transform_3(%arg0: i32, %arg1: i32) -> (i32, i32) {
    %c0_i32 = arith.constant 0 : i32
    %c0_i32_0 = arith.constant 0 : i32
    return %arg1, %c0_i32 : i32, i32
  }
  func.func @transform_4(%arg0: i32, %arg1: i32) -> (i32, i32) {
    %c0_i32 = arith.constant 0 : i32
    %c0_i32_0 = arith.constant 0 : i32
    %c0_i32_1 = arith.constant 0 : i32
    return %c0_i32, %c0_i32_0 : i32, i32
  }
  func.func @transform_5(%arg0: i32, %arg1: i32) -> (i32, i32) {
    %c0_i32 = arith.constant 0 : i32
    %c0_i32_0 = arith.constant 0 : i32
    return %arg0, %c0_i32 : i32, i32
  }
}

</mosaic_0001>

<llo_original>
// kernel: _siglip_mlp_call.1
$region0: #{_siglip_mlp_call.1}
  #allocation0 [shape = 'u32[]', space=smem, size = 0x4, offset = 0x4, fixed_abs, tag = 'smem constant byte address 0x4 - core index']
  #allocation1 [shape = 'u32[144,128]{1,0:T(1,128)}', space=vmem, size = 0x12000, scoped, tag = 'internal scratch']
  #allocation2 [shape = 'f32[256,128]{1,0:T(8,128)}', space=vmem, size = 0x20000, scoped, tag = 'scratch operand']
  %s0 = inlined_call_operand.vmem [shape: f32[512,128], index: 0, kind: input, shape index: {}]
  %s1 = inlined_call_operand.vmem [shape: f32[128,512], index: 1, kind: input, shape index: {}]
  %s2 = inlined_call_operand.vmem [shape: f32[2,256], index: 2, kind: input, shape index: {}]
  %s3 = inlined_call_operand.vmem [shape: f32[512,128], index: 3, kind: input, shape index: {}]
  %s4 = inlined_call_operand.vmem [shape: f32[1,128], index: 4, kind: input, shape index: {}]
  %s5 = inlined_call_operand.vmem [shape: f32[512,128], index: 5, kind: output, shape index: {}]
  %s6 = sld [smem:[#allocation0]]
  $region84: #{_siglip_mlp_call.1} parent=0
    _
  %s8 = ssub.s32 1, %s6
  %s9 = scalar_select 0, %s8, %s6
  $region1: #{_siglip_mlp_call.1} parent=0
    #allocation3 [shape = 'u8[262144]{0}', space=vmem, size = 0x40000, scoped, tag = 'input window, operand 1']
    loop: start=0, step=1, limit=6
    $region2: #{_siglip_mlp_call.1} parent=1 // loop_pre_header
      _
    $region3: #{_siglip_mlp_call.1} parent=1 // loop_header
      %s11 = sphi 0, %s15
      %p12 = scmp.ge.s32.totalorder %s11, 6
      %s18 = sphi 0, %s30
      %s19 = sphi 0, %s26
      %s20 = sphi 0, %s18
      %s21 = sphi 0, %s19
      %s22 = sphi 0, %s20
      %s23 = sphi 0, %s21
      %s33 = sphi 0, %s35
      %s36 = sphi 0, %s33
      %s37 = sphi 0, %s36
      %s53 = sphi 0, %s37
      %s59 = sphi 0, %s61
      %s62 = sphi 0, %s59
      %s63 = sphi 0, %s62
      %s79 = sphi 0, %s63
      %s83 = sphi 0, %s83
      %s85 = sphi 0, %s83
      %s86 = sphi 0, %s85
      %s100 = sphi 0, %s86
      %s106 = sphi 0, %s108
      %s109 = sphi 0, %s106
      %s110 = sphi 0, %s109
      %s126 = sphi 0, %s110
      %s130 = sphi 0, %s130
      %s132 = sphi 0, %s130
      %s133 = sphi 0, %s132
      %s147 = sphi 0, %s133
      %s153 = sphi 0, %s155
      %s156 = sphi 0, %s153
      %s157 = sphi 0, %s156
      %s173 = sphi 0, %s157
    $region4: #{_siglip_mlp_call.1} parent=1 // loop_header_branch
      %14 = sbr.rel (%p12) target = $region8
    $region5: #{_siglip_mlp_call.1} parent=1 // loop_body
      %s16 = ssub.s32 %s11, 1
      %s17 = ssub.s32 %s11, 2
      %s24 = sadd.s32 1, %s19
      %p25 = scmp.ge.s32.totalorder %s24, 2
      %s26 = scalar_select %p25, 0, %s24
      %s27 = sadd.s32 1, %s18
      %s28 = scalar_select %p25, %s27, %s18
      %p29 = scmp.ge.s32.totalorder %s28, 2
      %s30 = scalar_select %p29, 0, %s28
      %s31 = ssub.s32 %s18, %s30
      %p32 = scmp.eq.s32.totalorder %s31, 0
      %s34 = sadd.s32 %s33, 1
      %s35 = scalar_select %p32, %s33, %s34
      %p38 = pneg %p32
      %p39 = scmp.eq.s32.totalorder %s11, 3
      %p40 = por %p38, %p39
      %p41 = scmp.ne.s32.totalorder %s33, %s36
      %p42 = scmp.eq.s32.totalorder %s11, 0
      %p43 = por %p41, %p42
      %p44 = scmp.ne.s32.totalorder %s33, %s36
      %p45 = scmp.eq.s32.totalorder %s16, 3
      %p46 = por %p44, %p45
      %p47 = scmp.ne.s32.totalorder %s36, %s37
      %p48 = scmp.eq.s32.totalorder %s16, 0
      %p49 = por %p47, %p48
      %p50 = scmp.ne.s32.totalorder %s36, %s37
      %p51 = scmp.eq.s32.totalorder %s17, 3
      %p52 = por %p50, %p51
      %p54 = scmp.ne.s32.totalorder %s37, %s53
      %p55 = scmp.eq.s32.totalorder %s17, 0
      %p56 = por %p54, %p55
      %s57 = ssub.s32 %s19, %s26
      %p58 = scmp.eq.s32.totalorder %s57, 0
      %s60 = sadd.s32 %s59, 1
      %s61 = scalar_select %p58, %s59, %s60
      %p64 = pneg %p58
      %p65 = scmp.eq.s32.totalorder %s11, 3
      %p66 = por %p64, %p65
      %p67 = scmp.ne.s32.totalorder %s59, %s62
      %p68 = scmp.eq.s32.totalorder %s11, 0
      %p69 = por %p67, %p68
      %p70 = scmp.ne.s32.totalorder %s59, %s62
      %p71 = scmp.eq.s32.totalorder %s16, 3
      %p72 = por %p70, %p71
      %p73 = scmp.ne.s32.totalorder %s62, %s63
      %p74 = scmp.eq.s32.totalorder %s16, 0
      %p75 = por %p73, %p74
      %p76 = scmp.ne.s32.totalorder %s62, %s63
      %p77 = scmp.eq.s32.totalorder %s17, 3
      %p78 = por %p76, %p77
      %p80 = scmp.ne.s32.totalorder %s63, %s79
      %p81 = scmp.eq.s32.totalorder %s17, 0
      %p82 = por %p80, %p81
      %s84 = sadd.s32 %s83, 1
      %p87 = scmp.eq.s32.totalorder %s11, 3
      %p88 = scmp.ne.s32.totalorder %s83, %s85
      %p89 = scmp.eq.s32.totalorder %s11, 0
      %p90 = por %p88, %p89
      %p91 = scmp.ne.s32.totalorder %s83, %s85
      %p92 = scmp.eq.s32.totalorder %s16, 3
      %p93 = por %p91, %p92
      %p94 = scmp.ne.s32.totalorder %s85, %s86
      %p95 = scmp.eq.s32.totalorder %s16, 0
      %p96 = por %p94, %p95
      %p97 = scmp.ne.s32.totalorder %s85, %s86
      %p98 = scmp.eq.s32.totalorder %s17, 3
      %p99 = por %p97, %p98
      %p101 = scmp.ne.s32.totalorder %s86, %s100
      %p102 = scmp.eq.s32.totalorder %s17, 0
      %p103 = por %p101, %p102
      %s104 = ssub.s32 %s19, %s26
      %p105 = scmp.eq.s32.totalorder %s104, 0
      %s107 = sadd.s32 %s106, 1
      %s108 = scalar_select %p105, %s106, %s107
      %p111 = pneg %p105
      %p112 = scmp.eq.s32.totalorder %s11, 3
      %p113 = por %p111, %p112
      %p114 = scmp.ne.s32.totalorder %s106, %s109
      %p115 = scmp.eq.s32.totalorder %s11, 0
      %p116 = por %p114, %p115
      %p117 = scmp.ne.s32.totalorder %s106, %s109
      %p118 = scmp.eq.s32.totalorder %s16, 3
      %p119 = por %p117, %p118
      %p120 = scmp.ne.s32.totalorder %s109, %s110
      %p121 = scmp.eq.s32.totalorder %s16, 0
      %p122 = por %p120, %p121
      %p123 = scmp.ne.s32.totalorder %s109, %s110
      %p124 = scmp.eq.s32.totalorder %s17, 3
      %p125 = por %p123, %p124
      %p127 = scmp.ne.s32.totalorder %s110, %s126
      %p128 = scmp.eq.s32.totalorder %s17, 0
      %p129 = por %p127, %p128
      %s131 = sadd.s32 %s130, 1
      %p134 = scmp.eq.s32.totalorder %s11, 3
      %p135 = scmp.ne.s32.totalorder %s130, %s132
      %p136 = scmp.eq.s32.totalorder %s11, 0
      %p137 = por %p135, %p136
      %p138 = scmp.ne.s32.totalorder %s130, %s132
      %p139 = scmp.eq.s32.totalorder %s16, 3
      %p140 = por %p138, %p139
      %p141 = scmp.ne.s32.totalorder %s132, %s133
      %p142 = scmp.eq.s32.totalorder %s16, 0
      %p143 = por %p141, %p142
      %p144 = scmp.ne.s32.totalorder %s132, %s133
      %p145 = scmp.eq.s32.totalorder %s17, 3
      %p146 = por %p144, %p145
      %p148 = scmp.ne.s32.totalorder %s133, %s147
      %p149 = scmp.eq.s32.totalorder %s17, 0
      %p150 = por %p148, %p149
      %s151 = ssub.s32 %s18, %s30
      %p152 = scmp.eq.s32.totalorder %s151, 0
      %s154 = sadd.s32 %s153, 1
      %s155 = scalar_select %p152, %s153, %s154
      %p158 = pneg %p152
      %p159 = scmp.eq.s32.totalorder %s11, 3
      %p160 = por %p158, %p159
      %p161 = scmp.ne.s32.totalorder %s153, %s156
      %p162 = scmp.eq.s32.totalorder %s11, 0
      %p163 = por %p161, %p162
      %p164 = scmp.ne.s32.totalorder %s153, %s156
      %p165 = scmp.eq.s32.totalorder %s16, 3
      %p166 = por %p164, %p165
      %p167 = scmp.ne.s32.totalorder %s156, %s157
      %p168 = scmp.eq.s32.totalorder %s16, 0
      %p169 = por %p167, %p168
      %p170 = scmp.ne.s32.totalorder %s156, %s157
      %p171 = scmp.eq.s32.totalorder %s17, 3
      %p172 = por %p170, %p171
      %p174 = scmp.ne.s32.totalorder %s157, %s173
      %p175 = scmp.eq.s32.totalorder %s17, 0
      %p176 = por %p174, %p175
      %p177 = scmp.le.s32.totalorder 1, %s11
      %p178 = scmp.lt.s32.totalorder %s11, 5
      %p179 = pnand %p177, %p178
      %p180 = pneg %p179
      // Predicated region
      $region9: #{_siglip_mlp_call.1} parent=5 // pred_check
        _
      $region10: #{_siglip_mlp_call.1} parent=5 // pred_check_branch
        %182 = sbr.rel (%p179) target = $region12
      $region11: #{_siglip_mlp_call.1} parent=5 // pred_region
        %s183 = ssub.s32 %s11, 1
        // Predicated region
        $region13: #{_siglip_mlp_call.1} parent=11 // pred_check
          %p184 = pneg %p96
        $region14: #{_siglip_mlp_call.1} parent=11 // pred_check_branch
          %186 = sbr.rel (%p184) target = $region16
        $region15: #{_siglip_mlp_call.1} parent=11 // pred_region
          _
        $region16: #{_siglip_mlp_call.1} parent=11 // pred_fallthru
          _
        // Predicated region
        $region17: #{_siglip_mlp_call.1} parent=11 // pred_check
          %p187 = pneg %p143
        $region18: #{_siglip_mlp_call.1} parent=11 // pred_check_branch
          %189 = sbr.rel (%p187) target = $region20
        $region19: #{_siglip_mlp_call.1} parent=11 // pred_region
          _
        $region20: #{_siglip_mlp_call.1} parent=11 // pred_fallthru
          _
      $region12: #{_siglip_mlp_call.1} parent=5 // pred_fallthru
        _
      %p190 = scmp.lt.s32.totalorder %s11, 4
      // Predicated region
      $region21: #{_siglip_mlp_call.1} parent=5 // pred_check
        %p191 = pneg %p190
      $region22: #{_siglip_mlp_call.1} parent=5 // pred_check_branch
        %193 = sbr.rel (%p191) target = $region24
      $region23: #{_siglip_mlp_call.1} parent=5 // pred_region
        // Predicated region
        $region25: #{_siglip_mlp_call.1} parent=23 // pred_check
          %p194 = pneg %p43
        $region26: #{_siglip_mlp_call.1} parent=23 // pred_check_branch
          %196 = sbr.rel (%p194) target = $region28
        $region27: #{_siglip_mlp_call.1} parent=23 // pred_region
          %s197 = smul.u32 32, %s18
          %p198 = scmp.lt.s32.totalorder %s197, 63
          %s199 = scalar_select %p198, %s197, 63
          %s200 = smul.addr %s199, 8
          %s201 = scalar_lea.vmem %s0, %s200
          %s202 = smul.u32 32, %s18
        $region28: #{_siglip_mlp_call.1} parent=23 // pred_fallthru
          _
        // Predicated region
        $region29: #{_siglip_mlp_call.1} parent=23 // pred_check
          %p203 = pneg %p69
        $region30: #{_siglip_mlp_call.1} parent=23 // pred_check_branch
          %205 = sbr.rel (%p203) target = $region32
        $region31: #{_siglip_mlp_call.1} parent=23 // pred_region
          %s206 = sand.u32 %s59, 1
          %s207 = sand.u32 %s59, 1
          %s208 = smul.addr %s207, 256
          %s209 = scalar_lea.vmem [#allocation3], %s208
          %s210 = smul.u32 2, %s19
          %s211 = smul.addr %s210, 8
          %s212 = scalar_lea.vmem %s1, %s211
          // Predicated region
          $region33: #{_siglip_mlp_call.1} parent=31 // pred_check
            _
          $region34: #{_siglip_mlp_call.1} parent=31 // pred_check_branch
            %214 = sbr.rel (0) target = $region36
          $region35: #{_siglip_mlp_call.1} parent=31 // pred_region
            // Predicated region
            $region37: #{_siglip_mlp_call.1} parent=35 // pred_check
              _
            $region38: #{_siglip_mlp_call.1} parent=35 // pred_check_branch
              %216 = sbr.rel (0) target = $region40
            $region39: #{_siglip_mlp_call.1} parent=35 // pred_region
              loop: start=0, step=1, limit=1
              $region41: #{_siglip_mlp_call.1} parent=39 // loop_pre_header
                _
              $region42: #{_siglip_mlp_call.1} parent=39 // loop_header
                %s218 = sphi 0, %s222
                %p219 = scmp.ge.s32.totalorder %s218, 1
                %s223 = sphi %s212, %s212
                %s224 = sphi %s209, %s209
              $region43: #{_siglip_mlp_call.1} parent=39 // loop_header_branch
                %221 = sbr.rel (%p219) target = $region47
              $region44: #{_siglip_mlp_call.1} parent=39 // loop_body
                %v225 = vld [vmem:[%s223] sm:$0xff]
                %226 = vst [vmem:[%s224] sm:$0xff] %v225
                %v227 = vld [vmem:[%s223 + $0x8] sm:$0xff]
                %228 = vst [vmem:[%s224 + $0x8] sm:$0xff] %v227
                %v229 = vld [vmem:[%s223 + $0x20] sm:$0xff]
                %230 = vst [vmem:[%s224 + $0x10] sm:$0xff] %v229
                %v231 = vld [vmem:[%s223 + $0x28] sm:$0xff]
                %232 = vst [vmem:[%s224 + $0x18] sm:$0xff] %v231
                %v233 = vld [vmem:[%s223 + $0x40] sm:$0xff]
                %234 = vst [vmem:[%s224 + $0x20] sm:$0xff] %v233
                %v235 = vld [vmem:[%s223 + $0x48] sm:$0xff]
                %236 = vst [vmem:[%s224 + $0x28] sm:$0xff] %v235
                %v237 = vld [vmem:[%s223 + $0x60] sm:$0xff]
                %238 = vst [vmem:[%s224 + $0x30] sm:$0xff] %v237
                %v239 = vld [vmem:[%s223 + $0x68] sm:$0xff]
                %240 = vst [vmem:[%s224 + $0x38] sm:$0xff] %v239
                %v241 = vld [vmem:[%s223 + $0x80] sm:$0xff]
                %242 = vst [vmem:[%s224 + $0x40] sm:$0xff] %v241
                %v243 = vld [vmem:[%s223 + $0x88] sm:$0xff]
                %244 = vst [vmem:[%s224 + $0x48] sm:$0xff] %v243
                %v245 = vld [vmem:[%s223 + $0xa0] sm:$0xff]
                %246 = vst [vmem:[%s224 + $0x50] sm:$0xff] %v245
                %v247 = vld [vmem:[%s223 + $0xa8] sm:$0xff]
                %248 = vst [vmem:[%s224 + $0x58] sm:$0xff] %v247
                %v249 = vld [vmem:[%s223 + $0xc0] sm:$0xff]
                %250 = vst [vmem:[%s224 + $0x60] sm:$0xff] %v249
                %v251 = vld [vmem:[%s223 + $0xc8] sm:$0xff]
                %252 = vst [vmem:[%s224 + $0x68] sm:$0xff] %v251
                %v253 = vld [vmem:[%s223 + $0xe0] sm:$0xff]
                %254 = vst [vmem:[%s224 + $0x70] sm:$0xff] %v253
                %v255 = vld [vmem:[%s223 + $0xe8] sm:$0xff]
                %256 = vst [vmem:[%s224 + $0x78] sm:$0xff] %v255
                %v257 = vld [vmem:[%s223 + $0x100] sm:$0xff]
                %258 = vst [vmem:[%s224 + $0x80] sm:$0xff] %v257
                %v259 = vld [vmem:[%s223 + $0x108] sm:$0xff]
                %260 = vst [vmem:[%s224 + $0x88] sm:$0xff] %v259
                %v261 = vld [vmem:[%s223 + $0x120] sm:$0xff]
                %262 = vst [vmem:[%s224 + $0x90] sm:$0xff] %v261
                %v263 = vld [vmem:[%s223 + $0x128] sm:$0xff]
                %264 = vst [vmem:[%s224 + $0x98] sm:$0xff] %v263
                %v265 = vld [vmem:[%s223 + $0x140] sm:$0xff]
                %266 = vst [vmem:[%s224 + $0xa0] sm:$0xff] %v265
                %v267 = vld [vmem:[%s223 + $0x148] sm:$0xff]
                %268 = vst [vmem:[%s224 + $0xa8] sm:$0xff] %v267
                %v269 = vld [vmem:[%s223 + $0x160] sm:$0xff]
                %270 = vst [vmem:[%s224 + $0xb0] sm:$0xff] %v269
                %v271 = vld [vmem:[%s223 + $0x168] sm:$0xff]
                %272 = vst [vmem:[%s224 + $0xb8] sm:$0xff] %v271
                %v273 = vld [vmem:[%s223 + $0x180] sm:$0xff]
                %274 = vst [vmem:[%s224 + $0xc0] sm:$0xff] %v273
                %v275 = vld [vmem:[%s223 + $0x188] sm:$0xff]
                %276 = vst [vmem:[%s224 + $0xc8] sm:$0xff] %v275
                %v277 = vld [vmem:[%s223 + $0x1a0] sm:$0xff]
                %278 = vst [vmem:[%s224 + $0xd0] sm:$0xff] %v277
                %v279 = vld [vmem:[%s223 + $0x1a8] sm:$0xff]
                %280 = vst [vmem:[%s224 + $0xd8] sm:$0xff] %v279
                %v281 = vld [vmem:[%s223 + $0x1c0] sm:$0xff]
                %282 = vst [vmem:[%s224 + $0xe0] sm:$0xff] %v281
                %v283 = vld [vmem:[%s223 + $0x1c8] sm:$0xff]
                %284 = vst [vmem:[%s224 + $0xe8] sm:$0xff] %v283
                %v285 = vld [vmem:[%s223 + $0x1e0] sm:$0xff]
                %286 = vst [vmem:[%s224 + $0xf0] sm:$0xff] %v285
                %v287 = vld [vmem:[%s223 + $0x1e8] sm:$0xff]
                %288 = vst [vmem:[%s224 + $0xf8] sm:$0xff] %v287
              $region45: #{_siglip_mlp_call.1} parent=39 // loop_footer
                %s222 = sadd.s32 1, %s218
              $region46: #{_siglip_mlp_call.1} parent=39 // loop_footer_branch
                %217 = sbr.rel target = $region42
              $region47: #{_siglip_mlp_call.1} parent=39 // loop_exit
                _
            $region40: #{_siglip_mlp_call.1} parent=35 // pred_fallthru
              _
            // Predicated region
            $region48: #{_siglip_mlp_call.1} parent=35 // pred_check
              _
            $region49: #{_siglip_mlp_call.1} parent=35 // pred_check_branch
              %290 = sbr.rel target = $region51
            $region50: #{_siglip_mlp_call.1} parent=35 // pred_region
              _
            $region51: #{_siglip_mlp_call.1} parent=35 // pred_fallthru
              _
          $region36: #{_siglip_mlp_call.1} parent=31 // pred_fallthru
            _
          %291 = vnop
        $region32: #{_siglip_mlp_call.1} parent=23 // pred_fallthru
          _
        // Predicated region
        $region52: #{_siglip_mlp_call.1} parent=23 // pred_check
          %p292 = pneg %p116
        $region53: #{_siglip_mlp_call.1} parent=23 // pred_check_branch
          %294 = sbr.rel (%p292) target = $region55
        $region54: #{_siglip_mlp_call.1} parent=23 // pred_region
          %s295 = smul.u32 32, %s19
          %p296 = scmp.lt.s32.totalorder %s295, 63
          %s297 = scalar_select %p296, %s295, 63
          %s298 = smul.addr %s297, 8
          %s299 = scalar_lea.vmem %s3, %s298
          %s300 = smul.u32 32, %s19
        $region55: #{_siglip_mlp_call.1} parent=23 // pred_fallthru
          _
      $region24: #{_siglip_mlp_call.1} parent=5 // pred_fallthru
        _
      %p301 = scmp.le.s32.totalorder 1, %s11
      %p302 = scmp.lt.s32.totalorder %s11, 5
      %p303 = pnand %p301, %p302
      %p304 = pneg %p303
      // Predicated region
      $region56: #{_siglip_mlp_call.1} parent=5 // pred_check
        _
      $region57: #{_siglip_mlp_call.1} parent=5 // pred_check_branch
        %306 = sbr.rel (%p303) target = $region59
      $region58: #{_siglip_mlp_call.1} parent=5 // pred_region
        %s307 = ssub.s32 %s11, 1
        %s308 = sand.u32 %s62, 1
        %s309 = sand.u32 %s62, 1
        %s310 = smul.addr %s309, 256
        %s311 = scalar_lea.vmem [#allocation3], %s310
        // Predicated region
        $region60: #{_siglip_mlp_call.1} parent=58 // pred_check
          %p312 = pneg %p75
        $region61: #{_siglip_mlp_call.1} parent=58 // pred_check_branch
          %314 = sbr.rel (%p312) target = $region63
        $region62: #{_siglip_mlp_call.1} parent=58 // pred_region
          _
        $region63: #{_siglip_mlp_call.1} parent=58 // pred_fallthru
          _
        %s315 = smul.u32 32, %s20
        %p316 = scmp.lt.s32.totalorder %s315, 63
        %s317 = scalar_select %p316, %s315, 63
        %s318 = smul.addr %s317, 8
        %s319 = scalar_lea.vmem %s0, %s318
        %p320 = pneg %p49
        %p321 = pneg %p46
        %s322 = sand.u32 %s62, 1
        %s323 = sand.u32 %s62, 1
        %s324 = smul.addr %s323, 256
        %s325 = scalar_lea.vmem [#allocation3], %s324
        %p326 = pneg %p75
        %p327 = pneg %p72
        %p328 = pneg %p96
        %p329 = pneg %p93
        %s330 = smul.u32 32, %s21
        %p331 = scmp.lt.s32.totalorder %s330, 63
        %s332 = scalar_select %p331, %s330, 63
        %s333 = smul.addr %s332, 8
        %s334 = scalar_lea.vmem %s3, %s333
        %p335 = pneg %p122
        %p336 = pneg %p119
        %p337 = pneg %p143
        %p338 = pneg %p140
        %p339 = pneg %p169
        %p340 = pneg %p166
        %s341 = smul.u32 32, %s20
        %p342 = scmp.lt.s32.totalorder %s341, 63
        %s343 = scalar_select %p342, %s341, 63
        %s344 = smul.addr %s343, 8
        %s345 = scalar_lea.vmem %s5, %s344
        %s346 = smul.u32 32, %s20
        %p347 = scmp.lt.s32.totalorder %s346, 63
        %s348 = scalar_select %p347, %s346, 63
        %s349 = smul.addr %s348, 8
        %s350 = scalar_lea.vmem %s0, %s349
        %s351 = smul.u32 32, %s20
        %s352 = smul.u32 2, %s21
        %s353 = smul.u32 32, %s21
        %p354 = scmp.lt.s32.totalorder %s353, 63
        %s355 = scalar_select %p354, %s353, 63
        %s356 = smul.addr %s355, 8
        %s357 = scalar_lea.vmem %s3, %s356
        %s358 = smul.u32 32, %s21
        %s359 = smul.u32 32, %s20
        %p360 = scmp.lt.s32.totalorder %s359, 63
        %s361 = scalar_select %p360, %s359, 63
        %s362 = smul.addr %s361, 8
        %s363 = scalar_lea.vmem %s5, %s362
        %s364 = smul.u32 32, %s20
        %p365 = scmp.eq.s32.totalorder %s21, 0
        // Predicated region
        $region64: #{_siglip_mlp_call.1} parent=58 // pred_check
          %p366 = pneg %p365
        $region65: #{_siglip_mlp_call.1} parent=58 // pred_check_branch
          %368 = sbr.rel (%p366) target = $region67
        $region66: #{_siglip_mlp_call.1} parent=58 // pred_region
          %v369 = vld [vmem:[%s4] sm:$0x1]
          %v371 = vlaneseq
          %v372 = vshrl.u32 %v371, 7
          %v373 = vsub.s32 0, %v372
          %v374 = vrot.slane %v369, %v373
          %376 = vst [vmem:[#allocation2] sm:$0xff] %v374
          %377 = vst [vmem:[#allocation2 + $0x8] sm:$0xff] %v374
          %378 = vst [vmem:[#allocation2 + $0x10] sm:$0xff] %v374
          %379 = vst [vmem:[#allocation2 + $0x18] sm:$0xff] %v374
          %380 = vst [vmem:[#allocation2 + $0x20] sm:$0xff] %v374
          %381 = vst [vmem:[#allocation2 + $0x28] sm:$0xff] %v374
          %382 = vst [vmem:[#allocation2 + $0x30] sm:$0xff] %v374
          %383 = vst [vmem:[#allocation2 + $0x38] sm:$0xff] %v374
          %384 = vst [vmem:[#allocation2 + $0x40] sm:$0xff] %v374
          %385 = vst [vmem:[#allocation2 + $0x48] sm:$0xff] %v374
          %386 = vst [vmem:[#allocation2 + $0x50] sm:$0xff] %v374
          %387 = vst [vmem:[#allocation2 + $0x58] sm:$0xff] %v374
          %388 = vst [vmem:[#allocation2 + $0x60] sm:$0xff] %v374
          %389 = vst [vmem:[#allocation2 + $0x68] sm:$0xff] %v374
          %390 = vst [vmem:[#allocation2 + $0x70] sm:$0xff] %v374
          %391 = vst [vmem:[#allocation2 + $0x78] sm:$0xff] %v374
          %392 = vst [vmem:[#allocation2 + $0x80] sm:$0xff] %v374
          %393 = vst [vmem:[#allocation2 + $0x88] sm:$0xff] %v374
          %394 = vst [vmem:[#allocation2 + $0x90] sm:$0xff] %v374
          %395 = vst [vmem:[#allocation2 + $0x98] sm:$0xff] %v374
          %396 = vst [vmem:[#allocation2 + $0xa0] sm:$0xff] %v374
          %397 = vst [vmem:[#allocation2 + $0xa8] sm:$0xff] %v374
          %398 = vst [vmem:[#allocation2 + $0xb0] sm:$0xff] %v374
          %399 = vst [vmem:[#allocation2 + $0xb8] sm:$0xff] %v374
          %400 = vst [vmem:[#allocation2 + $0xc0] sm:$0xff] %v374
          %401 = vst [vmem:[#allocation2 + $0xc8] sm:$0xff] %v374
          %402 = vst [vmem:[#allocation2 + $0xd0] sm:$0xff] %v374
          %403 = vst [vmem:[#allocation2 + $0xd8] sm:$0xff] %v374
          %404 = vst [vmem:[#allocation2 + $0xe0] sm:$0xff] %v374
          %405 = vst [vmem:[#allocation2 + $0xe8] sm:$0xff] %v374
          %406 = vst [vmem:[#allocation2 + $0xf0] sm:$0xff] %v374
          %407 = vst [vmem:[#allocation2 + $0xf8] sm:$0xff] %v374
        $region67: #{_siglip_mlp_call.1} parent=58 // pred_fallthru
          _
        %v408 = vld [vmem:[%s350] sm:$0xff]
        %v409 = vld [vmem:[%s350 + $0x8] sm:$0xff]
        %v410 = vld [vmem:[%s350 + $0x10] sm:$0xff]
        %v411 = vld [vmem:[%s350 + $0x18] sm:$0xff]
        %v412 = vld [vmem:[%s350 + $0x20] sm:$0xff]
        %v413 = vld [vmem:[%s350 + $0x28] sm:$0xff]
        %v414 = vld [vmem:[%s350 + $0x30] sm:$0xff]
        %v415 = vld [vmem:[%s350 + $0x38] sm:$0xff]
        %v416 = vld [vmem:[%s350 + $0x40] sm:$0xff]
        %v417 = vld [vmem:[%s350 + $0x48] sm:$0xff]
        %v418 = vld [vmem:[%s350 + $0x50] sm:$0xff]
        %v419 = vld [vmem:[%s350 + $0x58] sm:$0xff]
        %v420 = vld [vmem:[%s350 + $0x60] sm:$0xff]
        %v421 = vld [vmem:[%s350 + $0x68] sm:$0xff]
        %v422 = vld [vmem:[%s350 + $0x70] sm:$0xff]
        %v423 = vld [vmem:[%s350 + $0x78] sm:$0xff]
        %v424 = vld [vmem:[%s350 + $0x80] sm:$0xff]
        %v425 = vld [vmem:[%s350 + $0x88] sm:$0xff]
        %v426 = vld [vmem:[%s350 + $0x90] sm:$0xff]
        %v427 = vld [vmem:[%s350 + $0x98] sm:$0xff]
        %v428 = vld [vmem:[%s350 + $0xa0] sm:$0xff]
        %v429 = vld [vmem:[%s350 + $0xa8] sm:$0xff]
        %v430 = vld [vmem:[%s350 + $0xb0] sm:$0xff]
        %v431 = vld [vmem:[%s350 + $0xb8] sm:$0xff]
        %v432 = vld [vmem:[%s350 + $0xc0] sm:$0xff]
        %v433 = vld [vmem:[%s350 + $0xc8] sm:$0xff]
        %v434 = vld [vmem:[%s350 + $0xd0] sm:$0xff]
        %v435 = vld [vmem:[%s350 + $0xd8] sm:$0xff]
        %v436 = vld [vmem:[%s350 + $0xe0] sm:$0xff]
        %v437 = vld [vmem:[%s350 + $0xe8] sm:$0xff]
        %v438 = vld [vmem:[%s350 + $0xf0] sm:$0xff]
        %v439 = vld [vmem:[%s350 + $0xf8] sm:$0xff]
        %v440 = vld [vmem:[%s311] sm:$0xff]
        %v441 = vld [vmem:[%s311 + $0x8] sm:$0xff]
        %v442 = vld [vmem:[%s311 + $0x10] sm:$0xff]
        %v443 = vld [vmem:[%s311 + $0x18] sm:$0xff]
        %v444 = vld [vmem:[%s311 + $0x20] sm:$0xff]
        %v445 = vld [vmem:[%s311 + $0x28] sm:$0xff]
        %v446 = vld [vmem:[%s311 + $0x30] sm:$0xff]
        %v447 = vld [vmem:[%s311 + $0x38] sm:$0xff]
        %v448 = vld [vmem:[%s311 + $0x40] sm:$0xff]
        %v449 = vld [vmem:[%s311 + $0x48] sm:$0xff]
        %v450 = vld [vmem:[%s311 + $0x50] sm:$0xff]
        %v451 = vld [vmem:[%s311 + $0x58] sm:$0xff]
        %v452 = vld [vmem:[%s311 + $0x60] sm:$0xff]
        %v453 = vld [vmem:[%s311 + $0x68] sm:$0xff]
        %v454 = vld [vmem:[%s311 + $0x70] sm:$0xff]
        %v455 = vld [vmem:[%s311 + $0x78] sm:$0xff]
        %v456 = vld [vmem:[%s311 + $0x80] sm:$0xff]
        %v457 = vld [vmem:[%s311 + $0x88] sm:$0xff]
        %v458 = vld [vmem:[%s311 + $0x90] sm:$0xff]
        %v459 = vld [vmem:[%s311 + $0x98] sm:$0xff]
        %v460 = vld [vmem:[%s311 + $0xa0] sm:$0xff]
        %v461 = vld [vmem:[%s311 + $0xa8] sm:$0xff]
        %v462 = vld [vmem:[%s311 + $0xb0] sm:$0xff]
        %v463 = vld [vmem:[%s311 + $0xb8] sm:$0xff]
        %v464 = vld [vmem:[%s311 + $0xc0] sm:$0xff]
        %v465 = vld [vmem:[%s311 + $0xc8] sm:$0xff]
        %v466 = vld [vmem:[%s311 + $0xd0] sm:$0xff]
        %v467 = vld [vmem:[%s311 + $0xd8] sm:$0xff]
        %v468 = vld [vmem:[%s311 + $0xe0] sm:$0xff]
        %v469 = vld [vmem:[%s311 + $0xe8] sm:$0xff]
        %v470 = vld [vmem:[%s311 + $0xf0] sm:$0xff]
        %v471 = vld [vmem:[%s311 + $0xf8] sm:$0xff]
        %s472 = sshra.s32 %s21, 1
        %s473 = sand.u32 %s21, 1
        %s474 = sshra.s32 %s21, 1
        %s475 = sand.u32 %s21, 1
        %s476 = smul.u32 %s472, 2
        %s477 = smul.u32 %s476, 2
        %s478 = sadd.s32 %s477, %s475
        %s479 = scalar_lea.vmem %s2, %s478
        %v480 = vld [vmem:[%s479] ss:$2 sm:$0x3]
        %v482 = vlaneseq
        %v483 = vshrl.u32 %v482, 7
        %v484 = vsub.s32 0, %v483
        %v485 = vrot.slane %v480, %v484
        %v486 = vlaneseq
        %v487 = vshrl.u32 %v486, 7
        %v488 = vsub.s32 1, %v487
        %v489 = vrot.slane %v480, %v488
        %492 = vmatprep.subr.mxu0 %v471
        %493 = vmatpush1.msra.mxu0 %v470
        %494 = vmatprep.subr.mxu0 %v469
        %495 = vmatpush1.msra.mxu0 %v468
        %496 = vmatprep.subr.mxu0 %v467
        %497 = vmatpush1.msra.mxu0 %v466
        %498 = vmatprep.subr.mxu0 %v465
        %499 = vmatpush1.msra.mxu0 %v464
        %500 = vmatprep.subr.mxu0 %v463
        %501 = vmatpush1.msra.mxu0 %v462
        %502 = vmatprep.subr.mxu0 %v461
        %503 = vmatpush1.msra.mxu0 %v460
        %504 = vmatprep.subr.mxu0 %v459
        %505 = vmatpush1.msra.mxu0 %v458
        %506 = vmatprep.subr.mxu0 %v457
        %507 = vmatpush1.msra.mxu0 %v456
        %508 = vmatprep.subr.mxu0 %v455
        %509 = vmatpush1.msra.mxu0 %v454
        %510 = vmatprep.subr.mxu0 %v453
        %511 = vmatpush1.msra.mxu0 %v452
        %512 = vmatprep.subr.mxu0 %v451
        %513 = vmatpush1.msra.mxu0 %v450
        %514 = vmatprep.subr.mxu0 %v449
        %515 = vmatpush1.msra.mxu0 %v448
        %516 = vmatprep.subr.mxu0 %v447
        %517 = vmatpush1.msra.mxu0 %v446
        %518 = vmatprep.subr.mxu0 %v445
        %519 = vmatpush1.msra.mxu0 %v444
        %520 = vmatprep.subr.mxu0 %v443
        %521 = vmatpush1.msra.mxu0 %v442
        %522 = vmatprep.subr.mxu0 %v441
        %523 = vmatpush1.msra.mxu0 %v440
        %524 = vmatprep.subr.mxu0 0.0
        %525 = vmatpush2.msra.mxu0 0.0
        %526 = vmatprep.subr.mxu0 0.0
        %527 = vmatpush2.msra.mxu0 0.0
        %528 = vmatprep.subr.mxu0 0.0
        %529 = vmatpush2.msra.mxu0 0.0
        %530 = vmatprep.subr.mxu0 0.0
        %531 = vmatpush2.msra.mxu0 0.0
        %532 = vmatprep.subr.mxu0 0.0
        %533 = vmatpush2.msra.mxu0 0.0
        %534 = vmatprep.subr.mxu0 0.0
        %535 = vmatpush2.msra.mxu0 0.0
        %536 = vmatprep.subr.mxu0 0.0
        %537 = vmatpush2.msra.mxu0 0.0
        %538 = vmatprep.subr.mxu0 0.0
        %539 = vmatpush2.msra.mxu0 0.0
        %540 = vmatprep.subr.mxu0 0.0
        %541 = vmatpush2.msra.mxu0 0.0
        %542 = vmatprep.subr.mxu0 0.0
        %543 = vmatpush2.msra.mxu0 0.0
        %544 = vmatprep.subr.mxu0 0.0
        %545 = vmatpush2.msra.mxu0 0.0
        %546 = vmatprep.subr.mxu0 0.0
        %547 = vmatpush2.msra.mxu0 0.0
        %548 = vmatprep.subr.mxu0 0.0
        %549 = vmatpush2.msra.mxu0 0.0
        %550 = vmatprep.subr.mxu0 0.0
        %551 = vmatpush2.msra.mxu0 0.0
        %552 = vmatprep.subr.mxu0 0.0
        %553 = vmatpush2.msra.mxu0 0.0
        %554 = vmatprep.subr.mxu0 0.0
        %555 = vmatpush2.msra.mxu0 0.0
        %556 = vmatprep.mubr.f32.mxu0 0.0
        %557 = vmatmul.mubr.f32.gmra.mxu0 %v408
        %v558 = vpop.f32.mrf.mxu0
        %v559 = vadd.f32 %v485, %v558
        %v560 = vpop.f32.mrf.mxu0
        %v561 = vadd.f32 %v489, %v560
        %562 = vmatprep.mubr.f32.mxu0 0.0
        %563 = vmatmul.mubr.f32.gmra.mxu0 %v409
        %v564 = vpop.f32.mrf.mxu0
        %v565 = vadd.f32 %v485, %v564
        %v566 = vpop.f32.mrf.mxu0
        %v567 = vadd.f32 %v489, %v566
        %568 = vmatprep.mubr.f32.mxu0 0.0
        %569 = vmatmul.mubr.f32.gmra.mxu0 %v410
        %v570 = vpop.f32.mrf.mxu0
        %v571 = vadd.f32 %v485, %v570
        %v572 = vpop.f32.mrf.mxu0
        %v573 = vadd.f32 %v489, %v572
        %574 = vmatprep.mubr.f32.mxu0 0.0
        %575 = vmatmul.mubr.f32.gmra.mxu0 %v411
        %v576 = vpop.f32.mrf.mxu0
        %v577 = vadd.f32 %v485, %v576
        %v578 = vpop.f32.mrf.mxu0
        %v579 = vadd.f32 %v489, %v578
        %580 = vmatprep.mubr.f32.mxu0 0.0
        %581 = vmatmul.mubr.f32.gmra.mxu0 %v412
        %v582 = vpop.f32.mrf.mxu0
        %v583 = vadd.f32 %v485, %v582
        %v584 = vpop.f32.mrf.mxu0
        %v585 = vadd.f32 %v489, %v584
        %586 = vmatprep.mubr.f32.mxu0 0.0
        %587 = vmatmul.mubr.f32.gmra.mxu0 %v413
        %v588 = vpop.f32.mrf.mxu0
        %v589 = vadd.f32 %v485, %v588
        %v590 = vpop.f32.mrf.mxu0
        %v591 = vadd.f32 %v489, %v590
        %592 = vmatprep.mubr.f32.mxu0 0.0
        %593 = vmatmul.mubr.f32.gmra.mxu0 %v414
        %v594 = vpop.f32.mrf.mxu0
        %v595 = vadd.f32 %v485, %v594
        %v596 = vpop.f32.mrf.mxu0
        %v597 = vadd.f32 %v489, %v596
        %598 = vmatprep.mubr.f32.mxu0 0.0
        %599 = vmatmul.mubr.f32.gmra.mxu0 %v415
        %v600 = vpop.f32.mrf.mxu0
        %v601 = vadd.f32 %v485, %v600
        %v602 = vpop.f32.mrf.mxu0
        %v603 = vadd.f32 %v489, %v602
        %604 = vmatprep.mubr.f32.mxu0 0.0
        %605 = vmatmul.mubr.f32.gmra.mxu0 %v416
        %v606 = vpop.f32.mrf.mxu0
        %v607 = vadd.f32 %v485, %v606
        %v608 = vpop.f32.mrf.mxu0
        %v609 = vadd.f32 %v489, %v608
        %610 = vmatprep.mubr.f32.mxu0 0.0
        %611 = vmatmul.mubr.f32.gmra.mxu0 %v417
        %v612 = vpop.f32.mrf.mxu0
        %v613 = vadd.f32 %v485, %v612
        %v614 = vpop.f32.mrf.mxu0
        %v615 = vadd.f32 %v489, %v614
        %616 = vmatprep.mubr.f32.mxu0 0.0
        %617 = vmatmul.mubr.f32.gmra.mxu0 %v418
        %v618 = vpop.f32.mrf.mxu0
        %v619 = vadd.f32 %v485, %v618
        %v620 = vpop.f32.mrf.mxu0
        %v621 = vadd.f32 %v489, %v620
        %622 = vmatprep.mubr.f32.mxu0 0.0
        %623 = vmatmul.mubr.f32.gmra.mxu0 %v419
        %v624 = vpop.f32.mrf.mxu0
        %v625 = vadd.f32 %v485, %v624
        %v626 = vpop.f32.mrf.mxu0
        %v627 = vadd.f32 %v489, %v626
        %628 = vmatprep.mubr.f32.mxu0 0.0
        %629 = vmatmul.mubr.f32.gmra.mxu0 %v420
        %v630 = vpop.f32.mrf.mxu0
        %v631 = vadd.f32 %v485, %v630
        %v632 = vpop.f32.mrf.mxu0
        %v633 = vadd.f32 %v489, %v632
        %634 = vmatprep.mubr.f32.mxu0 0.0
        %635 = vmatmul.mubr.f32.gmra.mxu0 %v421
        %v636 = vpop.f32.mrf.mxu0
        %v637 = vadd.f32 %v485, %v636
        %v638 = vpop.f32.mrf.mxu0
        %v639 = vadd.f32 %v489, %v638
        %640 = vmatprep.mubr.f32.mxu0 0.0
        %641 = vmatmul.mubr.f32.gmra.mxu0 %v422
        %v642 = vpop.f32.mrf.mxu0
        %v643 = vadd.f32 %v485, %v642
        %v644 = vpop.f32.mrf.mxu0
        %v645 = vadd.f32 %v489, %v644
        %646 = vmatprep.mubr.f32.mxu0 0.0
        %647 = vmatmul.mubr.f32.gmra.mxu0 %v423
        %v648 = vpop.f32.mrf.mxu0
        %v649 = vadd.f32 %v485, %v648
        %v650 = vpop.f32.mrf.mxu0
        %v651 = vadd.f32 %v489, %v650
        %652 = vmatprep.mubr.f32.mxu0 0.0
        %653 = vmatmul.mubr.f32.gmra.mxu0 %v424
        %v654 = vpop.f32.mrf.mxu0
        %v655 = vadd.f32 %v485, %v654
        %v656 = vpop.f32.mrf.mxu0
        %v657 = vadd.f32 %v489, %v656
        %658 = vmatprep.mubr.f32.mxu0 0.0
        %659 = vmatmul.mubr.f32.gmra.mxu0 %v425
        %v660 = vpop.f32.mrf.mxu0
        %v661 = vadd.f32 %v485, %v660
        %v662 = vpop.f32.mrf.mxu0
        %v663 = vadd.f32 %v489, %v662
        %664 = vmatprep.mubr.f32.mxu0 0.0
        %665 = vmatmul.mubr.f32.gmra.mxu0 %v426
        %v666 = vpop.f32.mrf.mxu0
        %v667 = vadd.f32 %v485, %v666
        %v668 = vpop.f32.mrf.mxu0
        %v669 = vadd.f32 %v489, %v668
        %670 = vmatprep.mubr.f32.mxu0 0.0
        %671 = vmatmul.mubr.f32.gmra.mxu0 %v427
        %v672 = vpop.f32.mrf.mxu0
        %v673 = vadd.f32 %v485, %v672
        %v674 = vpop.f32.mrf.mxu0
        %v675 = vadd.f32 %v489, %v674
        %676 = vmatprep.mubr.f32.mxu0 0.0
        %677 = vmatmul.mubr.f32.gmra.mxu0 %v428
        %v678 = vpop.f32.mrf.mxu0
        %v679 = vadd.f32 %v485, %v678
        %v680 = vpop.f32.mrf.mxu0
        %v681 = vadd.f32 %v489, %v680
        %682 = vmatprep.mubr.f32.mxu0 0.0
        %683 = vmatmul.mubr.f32.gmra.mxu0 %v429
        %v684 = vpop.f32.mrf.mxu0
        %v685 = vadd.f32 %v485, %v684
        %v686 = vpop.f32.mrf.mxu0
        %v687 = vadd.f32 %v489, %v686
        %688 = vmatprep.mubr.f32.mxu0 0.0
        %689 = vmatmul.mubr.f32.gmra.mxu0 %v430
        %v690 = vpop.f32.mrf.mxu0
        %v691 = vadd.f32 %v485, %v690
        %v692 = vpop.f32.mrf.mxu0
        %v693 = vadd.f32 %v489, %v692
        %694 = vmatprep.mubr.f32.mxu0 0.0
        %695 = vmatmul.mubr.f32.gmra.mxu0 %v431
        %v696 = vpop.f32.mrf.mxu0
        %v697 = vadd.f32 %v485, %v696
        %v698 = vpop.f32.mrf.mxu0
        %v699 = vadd.f32 %v489, %v698
        %700 = vmatprep.mubr.f32.mxu0 0.0
        %701 = vmatmul.mubr.f32.gmra.mxu0 %v432
        %v702 = vpop.f32.mrf.mxu0
        %v703 = vadd.f32 %v485, %v702
        %v704 = vpop.f32.mrf.mxu0
        %v705 = vadd.f32 %v489, %v704
        %706 = vmatprep.mubr.f32.mxu0 0.0
        %707 = vmatmul.mubr.f32.gmra.mxu0 %v433
        %v708 = vpop.f32.mrf.mxu0
        %v709 = vadd.f32 %v485, %v708
        %v710 = vpop.f32.mrf.mxu0
        %v711 = vadd.f32 %v489, %v710
        %712 = vmatprep.mubr.f32.mxu0 0.0
        %713 = vmatmul.mubr.f32.gmra.mxu0 %v434
        %v714 = vpop.f32.mrf.mxu0
        %v715 = vadd.f32 %v485, %v714
        %v716 = vpop.f32.mrf.mxu0
        %v717 = vadd.f32 %v489, %v716
        %718 = vmatprep.mubr.f32.mxu0 0.0
        %719 = vmatmul.mubr.f32.gmra.mxu0 %v435
        %v720 = vpop.f32.mrf.mxu0
        %v721 = vadd.f32 %v485, %v720
        %v722 = vpop.f32.mrf.mxu0
        %v723 = vadd.f32 %v489, %v722
        %724 = vmatprep.mubr.f32.mxu0 0.0
        %725 = vmatmul.mubr.f32.gmra.mxu0 %v436
        %v726 = vpop.f32.mrf.mxu0
        %v727 = vadd.f32 %v485, %v726
        %v728 = vpop.f32.mrf.mxu0
        %v729 = vadd.f32 %v489, %v728
        %730 = vmatprep.mubr.f32.mxu0 0.0
        %731 = vmatmul.mubr.f32.gmra.mxu0 %v437
        %v732 = vpop.f32.mrf.mxu0
        %v733 = vadd.f32 %v485, %v732
        %v734 = vpop.f32.mrf.mxu0
        %v735 = vadd.f32 %v489, %v734
        %736 = vmatprep.mubr.f32.mxu0 0.0
        %737 = vmatmul.mubr.f32.gmra.mxu0 %v438
        %v738 = vpop.f32.mrf.mxu0
        %v739 = vadd.f32 %v485, %v738
        %v740 = vpop.f32.mrf.mxu0
        %v741 = vadd.f32 %v489, %v740
        %742 = vmatprep.mubr.f32.mxu0 0.0
        %743 = vmatmul.mubr.f32.gmra.mxu0 %v439
        %v744 = vpop.f32.mrf.mxu0
        %v745 = vadd.f32 %v485, %v744
        %v746 = vpop.f32.mrf.mxu0
        %v747 = vadd.f32 %v489, %v746
        %748 = vdwg.mxu0
        %v749 = vmul.f32 %v559, 0.5
        %v750 = vmul.f32 %v561, 0.5
        %v751 = vmul.f32 %v565, 0.5
        %v752 = vmul.f32 %v567, 0.5
        %v753 = vmul.f32 %v571, 0.5
        %v754 = vmul.f32 %v573, 0.5
        %v755 = vmul.f32 %v577, 0.5
        %v756 = vmul.f32 %v579, 0.5
        %v757 = vmul.f32 %v583, 0.5
        %v758 = vmul.f32 %v585, 0.5
        %v759 = vmul.f32 %v589, 0.5
        %v760 = vmul.f32 %v591, 0.5
        %v761 = vmul.f32 %v595, 0.5
        %v762 = vmul.f32 %v597, 0.5
        %v763 = vmul.f32 %v601, 0.5
        %v764 = vmul.f32 %v603, 0.5
        %v765 = vmul.f32 %v607, 0.5
        %v766 = vmul.f32 %v609, 0.5
        %v767 = vmul.f32 %v613, 0.5
        %v768 = vmul.f32 %v615, 0.5
        %v769 = vmul.f32 %v619, 0.5
        %v770 = vmul.f32 %v621, 0.5
        %v771 = vmul.f32 %v625, 0.5
        %v772 = vmul.f32 %v627, 0.5
        %v773 = vmul.f32 %v631, 0.5
        %v774 = vmul.f32 %v633, 0.5
        %v775 = vmul.f32 %v637, 0.5
        %v776 = vmul.f32 %v639, 0.5
        %v777 = vmul.f32 %v643, 0.5
        %v778 = vmul.f32 %v645, 0.5
        %v779 = vmul.f32 %v649, 0.5
        %v780 = vmul.f32 %v651, 0.5
        %v781 = vmul.f32 %v655, 0.5
        %v782 = vmul.f32 %v657, 0.5
        %v783 = vmul.f32 %v661, 0.5
        %v784 = vmul.f32 %v663, 0.5
        %v785 = vmul.f32 %v667, 0.5
        %v786 = vmul.f32 %v669, 0.5
        %v787 = vmul.f32 %v673, 0.5
        %v788 = vmul.f32 %v675, 0.5
        %v789 = vmul.f32 %v679, 0.5
        %v790 = vmul.f32 %v681, 0.5
        %v791 = vmul.f32 %v685, 0.5
        %v792 = vmul.f32 %v687, 0.5
        %v793 = vmul.f32 %v691, 0.5
        %v794 = vmul.f32 %v693, 0.5
        %v795 = vmul.f32 %v697, 0.5
        %v796 = vmul.f32 %v699, 0.5
        %v797 = vmul.f32 %v703, 0.5
        %v798 = vmul.f32 %v705, 0.5
        %v799 = vmul.f32 %v709, 0.5
        %v800 = vmul.f32 %v711, 0.5
        %v801 = vmul.f32 %v715, 0.5
        %v802 = vmul.f32 %v717, 0.5
        %v803 = vmul.f32 %v721, 0.5
        %v804 = vmul.f32 %v723, 0.5
        %v805 = vmul.f32 %v727, 0.5
        %v806 = vmul.f32 %v729, 0.5
        %v807 = vmul.f32 %v733, 0.5
        %v808 = vmul.f32 %v735, 0.5
        %v809 = vmul.f32 %v739, 0.5
        %v810 = vmul.f32 %v741, 0.5
        %v811 = vmul.f32 %v745, 0.5
        %v812 = vmul.f32 %v747, 0.5
        %v813 = vmul.f32 %v559, 0.044715
        %v814 = vmul.f32 %v561, 0.044715
        %v815 = vmul.f32 %v565, 0.044715
        %v816 = vmul.f32 %v567, 0.044715
        %v817 = vmul.f32 %v571, 0.044715
        %v818 = vmul.f32 %v573, 0.044715
        %v819 = vmul.f32 %v577, 0.044715
        %v820 = vmul.f32 %v579, 0.044715
        %v821 = vmul.f32 %v583, 0.044715
        %v822 = vmul.f32 %v585, 0.044715
        %v823 = vmul.f32 %v589, 0.044715
        %v824 = vmul.f32 %v591, 0.044715
        %v825 = vmul.f32 %v595, 0.044715
        %v826 = vmul.f32 %v597, 0.044715
        %v827 = vmul.f32 %v601, 0.044715
        %v828 = vmul.f32 %v603, 0.044715
        %v829 = vmul.f32 %v607, 0.044715
        %v830 = vmul.f32 %v609, 0.044715
        %v831 = vmul.f32 %v613, 0.044715
        %v832 = vmul.f32 %v615, 0.044715
        %v833 = vmul.f32 %v619, 0.044715
        %v834 = vmul.f32 %v621, 0.044715
        %v835 = vmul.f32 %v625, 0.044715
        %v836 = vmul.f32 %v627, 0.044715
        %v837 = vmul.f32 %v631, 0.044715
        %v838 = vmul.f32 %v633, 0.044715
        %v839 = vmul.f32 %v637, 0.044715
        %v840 = vmul.f32 %v639, 0.044715
        %v841 = vmul.f32 %v643, 0.044715
        %v842 = vmul.f32 %v645, 0.044715
        %v843 = vmul.f32 %v649, 0.044715
        %v844 = vmul.f32 %v651, 0.044715
        %v845 = vmul.f32 %v655, 0.044715
        %v846 = vmul.f32 %v657, 0.044715
        %v847 = vmul.f32 %v661, 0.044715
        %v848 = vmul.f32 %v663, 0.044715
        %v849 = vmul.f32 %v667, 0.044715
        %v850 = vmul.f32 %v669, 0.044715
        %v851 = vmul.f32 %v673, 0.044715
        %v852 = vmul.f32 %v675, 0.044715
        %v853 = vmul.f32 %v679, 0.044715
        %v854 = vmul.f32 %v681, 0.044715
        %v855 = vmul.f32 %v685, 0.044715
        %v856 = vmul.f32 %v687, 0.044715
        %v857 = vmul.f32 %v691, 0.044715
        %v858 = vmul.f32 %v693, 0.044715
        %v859 = vmul.f32 %v697, 0.044715
        %v860 = vmul.f32 %v699, 0.044715
        %v861 = vmul.f32 %v703, 0.044715
        %v862 = vmul.f32 %v705, 0.044715
        %v863 = vmul.f32 %v709, 0.044715
        %v864 = vmul.f32 %v711, 0.044715
        %v865 = vmul.f32 %v715, 0.044715
        %v866 = vmul.f32 %v717, 0.044715
        %v867 = vmul.f32 %v721, 0.044715
        %v868 = vmul.f32 %v723, 0.044715
        %v869 = vmul.f32 %v727, 0.044715
        %v870 = vmul.f32 %v729, 0.044715
        %v871 = vmul.f32 %v733, 0.044715
        %v872 = vmul.f32 %v735, 0.044715
        %v873 = vmul.f32 %v739, 0.044715
        %v874 = vmul.f32 %v741, 0.044715
        %v875 = vmul.f32 %v745, 0.044715
        %v876 = vmul.f32 %v747, 0.044715
        %v877 = vmul.f32 %v813, %v559
        %v878 = vmul.f32 %v814, %v561
        %v879 = vmul.f32 %v815, %v565
        %v880 = vmul.f32 %v816, %v567
        %v881 = vmul.f32 %v817, %v571
        %v882 = vmul.f32 %v818, %v573
        %v883 = vmul.f32 %v819, %v577
        %v884 = vmul.f32 %v820, %v579
        %v885 = vmul.f32 %v821, %v583
        %v886 = vmul.f32 %v822, %v585
        %v887 = vmul.f32 %v823, %v589
        %v888 = vmul.f32 %v824, %v591
        %v889 = vmul.f32 %v825, %v595
        %v890 = vmul.f32 %v826, %v597
        %v891 = vmul.f32 %v827, %v601
        %v892 = vmul.f32 %v828, %v603
        %v893 = vmul.f32 %v829, %v607
        %v894 = vmul.f32 %v830, %v609
        %v895 = vmul.f32 %v831, %v613
        %v896 = vmul.f32 %v832, %v615
        %v897 = vmul.f32 %v833, %v619
        %v898 = vmul.f32 %v834, %v621
        %v899 = vmul.f32 %v835, %v625
        %v900 = vmul.f32 %v836, %v627
        %v901 = vmul.f32 %v837, %v631
        %v902 = vmul.f32 %v838, %v633
        %v903 = vmul.f32 %v839, %v637
        %v904 = vmul.f32 %v840, %v639
        %v905 = vmul.f32 %v841, %v643
        %v906 = vmul.f32 %v842, %v645
        %v907 = vmul.f32 %v843, %v649
        %v908 = vmul.f32 %v844, %v651
        %v909 = vmul.f32 %v845, %v655
        %v910 = vmul.f32 %v846, %v657
        %v911 = vmul.f32 %v847, %v661
        %v912 = vmul.f32 %v848, %v663
        %v913 = vmul.f32 %v849, %v667
        %v914 = vmul.f32 %v850, %v669
        %v915 = vmul.f32 %v851, %v673
        %v916 = vmul.f32 %v852, %v675
        %v917 = vmul.f32 %v853, %v679
        %v918 = vmul.f32 %v854, %v681
        %v919 = vmul.f32 %v855, %v685
        %v920 = vmul.f32 %v856, %v687
        %v921 = vmul.f32 %v857, %v691
        %v922 = vmul.f32 %v858, %v693
        %v923 = vmul.f32 %v859, %v697
        %v924 = vmul.f32 %v860, %v699
        %v925 = vmul.f32 %v861, %v703
        %v926 = vmul.f32 %v862, %v705
        %v927 = vmul.f32 %v863, %v709
        %v928 = vmul.f32 %v864, %v711
        %v929 = vmul.f32 %v865, %v715
        %v930 = vmul.f32 %v866, %v717
        %v931 = vmul.f32 %v867, %v721
        %v932 = vmul.f32 %v868, %v723
        %v933 = vmul.f32 %v869, %v727
        %v934 = vmul.f32 %v870, %v729
        %v935 = vmul.f32 %v871, %v733
        %v936 = vmul.f32 %v872, %v735
        %v937 = vmul.f32 %v873, %v739
        %v938 = vmul.f32 %v874, %v741
        %v939 = vmul.f32 %v875, %v745
        %v940 = vmul.f32 %v876, %v747
        %v941 = vmul.f32 %v877, %v559
        %v942 = vmul.f32 %v878, %v561
        %v943 = vmul.f32 %v879, %v565
        %v944 = vmul.f32 %v880, %v567
        %v945 = vmul.f32 %v881, %v571
        %v946 = vmul.f32 %v882, %v573
        %v947 = vmul.f32 %v883, %v577
        %v948 = vmul.f32 %v884, %v579
        %v949 = vmul.f32 %v885, %v583
        %v950 = vmul.f32 %v886, %v585
        %v951 = vmul.f32 %v887, %v589
        %v952 = vmul.f32 %v888, %v591
        %v953 = vmul.f32 %v889, %v595
        %v954 = vmul.f32 %v890, %v597
        %v955 = vmul.f32 %v891, %v601
        %v956 = vmul.f32 %v892, %v603
        %v957 = vmul.f32 %v893, %v607
        %v958 = vmul.f32 %v894, %v609
        %v959 = vmul.f32 %v895, %v613
        %v960 = vmul.f32 %v896, %v615
        %v961 = vmul.f32 %v897, %v619
        %v962 = vmul.f32 %v898, %v621
        %v963 = vmul.f32 %v899, %v625
        %v964 = vmul.f32 %v900, %v627
        %v965 = vmul.f32 %v901, %v631
        %v966 = vmul.f32 %v902, %v633
        %v967 = vmul.f32 %v903, %v637
        %v968 = vmul.f32 %v904, %v639
        %v969 = vmul.f32 %v905, %v643
        %v970 = vmul.f32 %v906, %v645
        %v971 = vmul.f32 %v907, %v649
        %v972 = vmul.f32 %v908, %v651
        %v973 = vmul.f32 %v909, %v655
        %v974 = vmul.f32 %v910, %v657
        %v975 = vmul.f32 %v911, %v661
        %v976 = vmul.f32 %v912, %v663
        %v977 = vmul.f32 %v913, %v667
        %v978 = vmul.f32 %v914, %v669
        %v979 = vmul.f32 %v915, %v673
        %v980 = vmul.f32 %v916, %v675
        %v981 = vmul.f32 %v917, %v679
        %v982 = vmul.f32 %v918, %v681
        %v983 = vmul.f32 %v919, %v685
        %v984 = vmul.f32 %v920, %v687
        %v985 = vmul.f32 %v921, %v691
        %v986 = vmul.f32 %v922, %v693
        %v987 = vmul.f32 %v923, %v697
        %v988 = vmul.f32 %v924, %v699
        %v989 = vmul.f32 %v925, %v703
        %v990 = vmul.f32 %v926, %v705
        %v991 = vmul.f32 %v927, %v709
        %v992 = vmul.f32 %v928, %v711
        %v993 = vmul.f32 %v929, %v715
        %v994 = vmul.f32 %v930, %v717
        %v995 = vmul.f32 %v931, %v721
        %v996 = vmul.f32 %v932, %v723
        %v997 = vmul.f32 %v933, %v727
        %v998 = vmul.f32 %v934, %v729
        %v999 = vmul.f32 %v935, %v733
        %v1000 = vmul.f32 %v936, %v735
        %v1001 = vmul.f32 %v937, %v739
        %v1002 = vmul.f32 %v938, %v741
        %v1003 = vmul.f32 %v939, %v745
        %v1004 = vmul.f32 %v940, %v747
        %v1005 = vadd.f32 %v559, %v941
        %v1006 = vadd.f32 %v561, %v942
        %v1007 = vadd.f32 %v565, %v943
        %v1008 = vadd.f32 %v567, %v944
        %v1009 = vadd.f32 %v571, %v945
        %v1010 = vadd.f32 %v573, %v946
        %v1011 = vadd.f32 %v577, %v947
        %v1012 = vadd.f32 %v579, %v948
        %v1013 = vadd.f32 %v583, %v949
        %v1014 = vadd.f32 %v585, %v950
        %v1015 = vadd.f32 %v589, %v951
        %v1016 = vadd.f32 %v591, %v952
        %v1017 = vadd.f32 %v595, %v953
        %v1018 = vadd.f32 %v597, %v954
        %v1019 = vadd.f32 %v601, %v955
        %v1020 = vadd.f32 %v603, %v956
        %v1021 = vadd.f32 %v607, %v957
        %v1022 = vadd.f32 %v609, %v958
        %v1023 = vadd.f32 %v613, %v959
        %v1024 = vadd.f32 %v615, %v960
        %v1025 = vadd.f32 %v619, %v961
        %v1026 = vadd.f32 %v621, %v962
        %v1027 = vadd.f32 %v625, %v963
        %v1028 = vadd.f32 %v627, %v964
        %v1029 = vadd.f32 %v631, %v965
        %v1030 = vadd.f32 %v633, %v966
        %v1031 = vadd.f32 %v637, %v967
        %v1032 = vadd.f32 %v639, %v968
        %v1033 = vadd.f32 %v643, %v969
        %v1034 = vadd.f32 %v645, %v970
        %v1035 = vadd.f32 %v649, %v971
        %v1036 = vadd.f32 %v651, %v972
        %v1037 = vadd.f32 %v655, %v973
        %v1038 = vadd.f32 %v657, %v974
        %v1039 = vadd.f32 %v661, %v975
        %v1040 = vadd.f32 %v663, %v976
        %v1041 = vadd.f32 %v667, %v977
        %v1042 = vadd.f32 %v669, %v978
        %v1043 = vadd.f32 %v673, %v979
        %v1044 = vadd.f32 %v675, %v980
        %v1045 = vadd.f32 %v679, %v981
        %v1046 = vadd.f32 %v681, %v982
        %v1047 = vadd.f32 %v685, %v983
        %v1048 = vadd.f32 %v687, %v984
        %v1049 = vadd.f32 %v691, %v985
        %v1050 = vadd.f32 %v693, %v986
        %v1051 = vadd.f32 %v697, %v987
        %v1052 = vadd.f32 %v699, %v988
        %v1053 = vadd.f32 %v703, %v989
        %v1054 = vadd.f32 %v705, %v990
        %v1055 = vadd.f32 %v709, %v991
        %v1056 = vadd.f32 %v711, %v992
        %v1057 = vadd.f32 %v715, %v993
        %v1058 = vadd.f32 %v717, %v994
        %v1059 = vadd.f32 %v721, %v995
        %v1060 = vadd.f32 %v723, %v996
        %v1061 = vadd.f32 %v727, %v997
        %v1062 = vadd.f32 %v729, %v998
        %v1063 = vadd.f32 %v733, %v999
        %v1064 = vadd.f32 %v735, %v1000
        %v1065 = vadd.f32 %v739, %v1001
        %v1066 = vadd.f32 %v741, %v1002
        %v1067 = vadd.f32 %v745, %v1003
        %v1068 = vadd.f32 %v747, %v1004
        %v1069 = vmul.f32 %v1005, 0.7978846
        %v1070 = vmul.f32 %v1006, 0.7978846
        %v1071 = vmul.f32 %v1007, 0.7978846
        %v1072 = vmul.f32 %v1008, 0.7978846
        %v1073 = vmul.f32 %v1009, 0.7978846
        %v1074 = vmul.f32 %v1010, 0.7978846
        %v1075 = vmul.f32 %v1011, 0.7978846
        %v1076 = vmul.f32 %v1012, 0.7978846
        %v1077 = vmul.f32 %v1013, 0.7978846
        %v1078 = vmul.f32 %v1014, 0.7978846
        %v1079 = vmul.f32 %v1015, 0.7978846
        %v1080 = vmul.f32 %v1016, 0.7978846
        %v1081 = vmul.f32 %v1017, 0.7978846
        %v1082 = vmul.f32 %v1018, 0.7978846
        %v1083 = vmul.f32 %v1019, 0.7978846
        %v1084 = vmul.f32 %v1020, 0.7978846
        %v1085 = vmul.f32 %v1021, 0.7978846
        %v1086 = vmul.f32 %v1022, 0.7978846
        %v1087 = vmul.f32 %v1023, 0.7978846
        %v1088 = vmul.f32 %v1024, 0.7978846
        %v1089 = vmul.f32 %v1025, 0.7978846
        %v1090 = vmul.f32 %v1026, 0.7978846
        %v1091 = vmul.f32 %v1027, 0.7978846
        %v1092 = vmul.f32 %v1028, 0.7978846
        %v1093 = vmul.f32 %v1029, 0.7978846
        %v1094 = vmul.f32 %v1030, 0.7978846
        %v1095 = vmul.f32 %v1031, 0.7978846
        %v1096 = vmul.f32 %v1032, 0.7978846
        %v1097 = vmul.f32 %v1033, 0.7978846
        %v1098 = vmul.f32 %v1034, 0.7978846
        %v1099 = vmul.f32 %v1035, 0.7978846
        %v1100 = vmul.f32 %v1036, 0.7978846
        %v1101 = vmul.f32 %v1037, 0.7978846
        %v1102 = vmul.f32 %v1038, 0.7978846
        %v1103 = vmul.f32 %v1039, 0.7978846
        %v1104 = vmul.f32 %v1040, 0.7978846
        %v1105 = vmul.f32 %v1041, 0.7978846
        %v1106 = vmul.f32 %v1042, 0.7978846
        %v1107 = vmul.f32 %v1043, 0.7978846
        %v1108 = vmul.f32 %v1044, 0.7978846
        %v1109 = vmul.f32 %v1045, 0.7978846
        %v1110 = vmul.f32 %v1046, 0.7978846
        %v1111 = vmul.f32 %v1047, 0.7978846
        %v1112 = vmul.f32 %v1048, 0.7978846
        %v1113 = vmul.f32 %v1049, 0.7978846
        %v1114 = vmul.f32 %v1050, 0.7978846
        %v1115 = vmul.f32 %v1051, 0.7978846
        %v1116 = vmul.f32 %v1052, 0.7978846
        %v1117 = vmul.f32 %v1053, 0.7978846
        %v1118 = vmul.f32 %v1054, 0.7978846
        %v1119 = vmul.f32 %v1055, 0.7978846
        %v1120 = vmul.f32 %v1056, 0.7978846
        %v1121 = vmul.f32 %v1057, 0.7978846
        %v1122 = vmul.f32 %v1058, 0.7978846
        %v1123 = vmul.f32 %v1059, 0.7978846
        %v1124 = vmul.f32 %v1060, 0.7978846
        %v1125 = vmul.f32 %v1061, 0.7978846
        %v1126 = vmul.f32 %v1062, 0.7978846
        %v1127 = vmul.f32 %v1063, 0.7978846
        %v1128 = vmul.f32 %v1064, 0.7978846
        %v1129 = vmul.f32 %v1065, 0.7978846
        %v1130 = vmul.f32 %v1066, 0.7978846
        %v1131 = vmul.f32 %v1067, 0.7978846
        %v1132 = vmul.f32 %v1068, 0.7978846
        %v1133 = vtanh.pop %v1069
        %v1134 = vtanh.pop %v1070
        %v1135 = vtanh.pop %v1071
        %v1136 = vtanh.pop %v1072
        %v1137 = vtanh.pop %v1073
        %v1138 = vtanh.pop %v1074
        %v1139 = vtanh.pop %v1075
        %v1140 = vtanh.pop %v1076
        %v1141 = vtanh.pop %v1077
        %v1142 = vtanh.pop %v1078
        %v1143 = vtanh.pop %v1079
        %v1144 = vtanh.pop %v1080
        %v1145 = vtanh.pop %v1081
        %v1146 = vtanh.pop %v1082
        %v1147 = vtanh.pop %v1083
        %v1148 = vtanh.pop %v1084
        %v1149 = vtanh.pop %v1085
        %v1150 = vtanh.pop %v1086
        %v1151 = vtanh.pop %v1087
        %v1152 = vtanh.pop %v1088
        %v1153 = vtanh.pop %v1089
        %v1154 = vtanh.pop %v1090
        %v1155 = vtanh.pop %v1091
        %v1156 = vtanh.pop %v1092
        %v1157 = vtanh.pop %v1093
        %v1158 = vtanh.pop %v1094
        %v1159 = vtanh.pop %v1095
        %v1160 = vtanh.pop %v1096
        %v1161 = vtanh.pop %v1097
        %v1162 = vtanh.pop %v1098
        %v1163 = vtanh.pop %v1099
        %v1164 = vtanh.pop %v1100
        %v1165 = vtanh.pop %v1101
        %v1166 = vtanh.pop %v1102
        %v1167 = vtanh.pop %v1103
        %v1168 = vtanh.pop %v1104
        %v1169 = vtanh.pop %v1105
        %v1170 = vtanh.pop %v1106
        %v1171 = vtanh.pop %v1107
        %v1172 = vtanh.pop %v1108
        %v1173 = vtanh.pop %v1109
        %v1174 = vtanh.pop %v1110
        %v1175 = vtanh.pop %v1111
        %v1176 = vtanh.pop %v1112
        %v1177 = vtanh.pop %v1113
        %v1178 = vtanh.pop %v1114
        %v1179 = vtanh.pop %v1115
        %v1180 = vtanh.pop %v1116
        %v1181 = vtanh.pop %v1117
        %v1182 = vtanh.pop %v1118
        %v1183 = vtanh.pop %v1119
        %v1184 = vtanh.pop %v1120
        %v1185 = vtanh.pop %v1121
        %v1186 = vtanh.pop %v1122
        %v1187 = vtanh.pop %v1123
        %v1188 = vtanh.pop %v1124
        %v1189 = vtanh.pop %v1125
        %v1190 = vtanh.pop %v1126
        %v1191 = vtanh.pop %v1127
        %v1192 = vtanh.pop %v1128
        %v1193 = vtanh.pop %v1129
        %v1194 = vtanh.pop %v1130
        %v1195 = vtanh.pop %v1131
        %v1196 = vtanh.pop %v1132
        %v1197 = vadd.f32 %v1133, 1.0
        %v1198 = vadd.f32 %v1134, 1.0
        %v1199 = vadd.f32 %v1135, 1.0
        %v1200 = vadd.f32 %v1136, 1.0
        %v1201 = vadd.f32 %v1137, 1.0
        %v1202 = vadd.f32 %v1138, 1.0
        %v1203 = vadd.f32 %v1139, 1.0
        %v1204 = vadd.f32 %v1140, 1.0
        %v1205 = vadd.f32 %v1141, 1.0
        %v1206 = vadd.f32 %v1142, 1.0
        %v1207 = vadd.f32 %v1143, 1.0
        %v1208 = vadd.f32 %v1144, 1.0
        %v1209 = vadd.f32 %v1145, 1.0
        %v1210 = vadd.f32 %v1146, 1.0
        %v1211 = vadd.f32 %v1147, 1.0
        %v1212 = vadd.f32 %v1148, 1.0
        %v1213 = vadd.f32 %v1149, 1.0
        %v1214 = vadd.f32 %v1150, 1.0
        %v1215 = vadd.f32 %v1151, 1.0
        %v1216 = vadd.f32 %v1152, 1.0
        %v1217 = vadd.f32 %v1153, 1.0
        %v1218 = vadd.f32 %v1154, 1.0
        %v1219 = vadd.f32 %v1155, 1.0
        %v1220 = vadd.f32 %v1156, 1.0
        %v1221 = vadd.f32 %v1157, 1.0
        %v1222 = vadd.f32 %v1158, 1.0
        %v1223 = vadd.f32 %v1159, 1.0
        %v1224 = vadd.f32 %v1160, 1.0
        %v1225 = vadd.f32 %v1161, 1.0
        %v1226 = vadd.f32 %v1162, 1.0
        %v1227 = vadd.f32 %v1163, 1.0
        %v1228 = vadd.f32 %v1164, 1.0
        %v1229 = vadd.f32 %v1165, 1.0
        %v1230 = vadd.f32 %v1166, 1.0
        %v1231 = vadd.f32 %v1167, 1.0
        %v1232 = vadd.f32 %v1168, 1.0
        %v1233 = vadd.f32 %v1169, 1.0
        %v1234 = vadd.f32 %v1170, 1.0
        %v1235 = vadd.f32 %v1171, 1.0
        %v1236 = vadd.f32 %v1172, 1.0
        %v1237 = vadd.f32 %v1173, 1.0
        %v1238 = vadd.f32 %v1174, 1.0
        %v1239 = vadd.f32 %v1175, 1.0
        %v1240 = vadd.f32 %v1176, 1.0
        %v1241 = vadd.f32 %v1177, 1.0
        %v1242 = vadd.f32 %v1178, 1.0
        %v1243 = vadd.f32 %v1179, 1.0
        %v1244 = vadd.f32 %v1180, 1.0
        %v1245 = vadd.f32 %v1181, 1.0
        %v1246 = vadd.f32 %v1182, 1.0
        %v1247 = vadd.f32 %v1183, 1.0
        %v1248 = vadd.f32 %v1184, 1.0
        %v1249 = vadd.f32 %v1185, 1.0
        %v1250 = vadd.f32 %v1186, 1.0
        %v1251 = vadd.f32 %v1187, 1.0
        %v1252 = vadd.f32 %v1188, 1.0
        %v1253 = vadd.f32 %v1189, 1.0
        %v1254 = vadd.f32 %v1190, 1.0
        %v1255 = vadd.f32 %v1191, 1.0
        %v1256 = vadd.f32 %v1192, 1.0
        %v1257 = vadd.f32 %v1193, 1.0
        %v1258 = vadd.f32 %v1194, 1.0
        %v1259 = vadd.f32 %v1195, 1.0
        %v1260 = vadd.f32 %v1196, 1.0
        %v1261 = vmul.f32 %v749, %v1197
        %v1262 = vmul.f32 %v750, %v1198
        %v1263 = vmul.f32 %v751, %v1199
        %v1264 = vmul.f32 %v752, %v1200
        %v1265 = vmul.f32 %v753, %v1201
        %v1266 = vmul.f32 %v754, %v1202
        %v1267 = vmul.f32 %v755, %v1203
        %v1268 = vmul.f32 %v756, %v1204
        %v1269 = vmul.f32 %v757, %v1205
        %v1270 = vmul.f32 %v758, %v1206
        %v1271 = vmul.f32 %v759, %v1207
        %v1272 = vmul.f32 %v760, %v1208
        %v1273 = vmul.f32 %v761, %v1209
        %v1274 = vmul.f32 %v762, %v1210
        %v1275 = vmul.f32 %v763, %v1211
        %v1276 = vmul.f32 %v764, %v1212
        %v1277 = vmul.f32 %v765, %v1213
        %v1278 = vmul.f32 %v766, %v1214
        %v1279 = vmul.f32 %v767, %v1215
        %v1280 = vmul.f32 %v768, %v1216
        %v1281 = vmul.f32 %v769, %v1217
        %v1282 = vmul.f32 %v770, %v1218
        %v1283 = vmul.f32 %v771, %v1219
        %v1284 = vmul.f32 %v772, %v1220
        %v1285 = vmul.f32 %v773, %v1221
        %v1286 = vmul.f32 %v774, %v1222
        %v1287 = vmul.f32 %v775, %v1223
        %v1288 = vmul.f32 %v776, %v1224
        %v1289 = vmul.f32 %v777, %v1225
        %v1290 = vmul.f32 %v778, %v1226
        %v1291 = vmul.f32 %v779, %v1227
        %v1292 = vmul.f32 %v780, %v1228
        %v1293 = vmul.f32 %v781, %v1229
        %v1294 = vmul.f32 %v782, %v1230
        %v1295 = vmul.f32 %v783, %v1231
        %v1296 = vmul.f32 %v784, %v1232
        %v1297 = vmul.f32 %v785, %v1233
        %v1298 = vmul.f32 %v786, %v1234
        %v1299 = vmul.f32 %v787, %v1235
        %v1300 = vmul.f32 %v788, %v1236
        %v1301 = vmul.f32 %v789, %v1237
        %v1302 = vmul.f32 %v790, %v1238
        %v1303 = vmul.f32 %v791, %v1239
        %v1304 = vmul.f32 %v792, %v1240
        %v1305 = vmul.f32 %v793, %v1241
        %v1306 = vmul.f32 %v794, %v1242
        %v1307 = vmul.f32 %v795, %v1243
        %v1308 = vmul.f32 %v796, %v1244
        %v1309 = vmul.f32 %v797, %v1245
        %v1310 = vmul.f32 %v798, %v1246
        %v1311 = vmul.f32 %v799, %v1247
        %v1312 = vmul.f32 %v800, %v1248
        %v1313 = vmul.f32 %v801, %v1249
        %v1314 = vmul.f32 %v802, %v1250
        %v1315 = vmul.f32 %v803, %v1251
        %v1316 = vmul.f32 %v804, %v1252
        %v1317 = vmul.f32 %v805, %v1253
        %v1318 = vmul.f32 %v806, %v1254
        %v1319 = vmul.f32 %v807, %v1255
        %v1320 = vmul.f32 %v808, %v1256
        %v1321 = vmul.f32 %v809, %v1257
        %v1322 = vmul.f32 %v810, %v1258
        %v1323 = vmul.f32 %v811, %v1259
        %v1324 = vmul.f32 %v812, %v1260
        %v1325 = vld [vmem:[#allocation2] sm:$0xff]
        %v1326 = vld [vmem:[#allocation2 + $0x8] sm:$0xff]
        %v1327 = vld [vmem:[#allocation2 + $0x10] sm:$0xff]
        %v1328 = vld [vmem:[#allocation2 + $0x18] sm:$0xff]
        %v1329 = vld [vmem:[#allocation2 + $0x20] sm:$0xff]
        %v1330 = vld [vmem:[#allocation2 + $0x28] sm:$0xff]
        %v1331 = vld [vmem:[#allocation2 + $0x30] sm:$0xff]
        %v1332 = vld [vmem:[#allocation2 + $0x38] sm:$0xff]
        %v1333 = vld [vmem:[#allocation2 + $0x40] sm:$0xff]
        %v1334 = vld [vmem:[#allocation2 + $0x48] sm:$0xff]
        %v1335 = vld [vmem:[#allocation2 + $0x50] sm:$0xff]
        %v1336 = vld [vmem:[#allocation2 + $0x58] sm:$0xff]
        %v1337 = vld [vmem:[#allocation2 + $0x60] sm:$0xff]
        %v1338 = vld [vmem:[#allocation2 + $0x68] sm:$0xff]
        %v1339 = vld [vmem:[#allocation2 + $0x70] sm:$0xff]
        %v1340 = vld [vmem:[#allocation2 + $0x78] sm:$0xff]
        %v1341 = vld [vmem:[#allocation2 + $0x80] sm:$0xff]
        %v1342 = vld [vmem:[#allocation2 + $0x88] sm:$0xff]
        %v1343 = vld [vmem:[#allocation2 + $0x90] sm:$0xff]
        %v1344 = vld [vmem:[#allocation2 + $0x98] sm:$0xff]
        %v1345 = vld [vmem:[#allocation2 + $0xa0] sm:$0xff]
        %v1346 = vld [vmem:[#allocation2 + $0xa8] sm:$0xff]
        %v1347 = vld [vmem:[#allocation2 + $0xb0] sm:$0xff]
        %v1348 = vld [vmem:[#allocation2 + $0xb8] sm:$0xff]
        %v1349 = vld [vmem:[#allocation2 + $0xc0] sm:$0xff]
        %v1350 = vld [vmem:[#allocation2 + $0xc8] sm:$0xff]
        %v1351 = vld [vmem:[#allocation2 + $0xd0] sm:$0xff]
        %v1352 = vld [vmem:[#allocation2 + $0xd8] sm:$0xff]
        %v1353 = vld [vmem:[#allocation2 + $0xe0] sm:$0xff]
        %v1354 = vld [vmem:[#allocation2 + $0xe8] sm:$0xff]
        %v1355 = vld [vmem:[#allocation2 + $0xf0] sm:$0xff]
        %v1356 = vld [vmem:[#allocation2 + $0xf8] sm:$0xff]
        %v1357 = vld [vmem:[%s357] sm:$0xff]
        %v1358 = vld [vmem:[%s357 + $0x8] sm:$0xff]
        %v1359 = vld [vmem:[%s357 + $0x10] sm:$0xff]
        %v1360 = vld [vmem:[%s357 + $0x18] sm:$0xff]
        %v1361 = vld [vmem:[%s357 + $0x20] sm:$0xff]
        %v1362 = vld [vmem:[%s357 + $0x28] sm:$0xff]
        %v1363 = vld [vmem:[%s357 + $0x30] sm:$0xff]
        %v1364 = vld [vmem:[%s357 + $0x38] sm:$0xff]
        %v1365 = vld [vmem:[%s357 + $0x40] sm:$0xff]
        %v1366 = vld [vmem:[%s357 + $0x48] sm:$0xff]
        %v1367 = vld [vmem:[%s357 + $0x50] sm:$0xff]
        %v1368 = vld [vmem:[%s357 + $0x58] sm:$0xff]
        %v1369 = vld [vmem:[%s357 + $0x60] sm:$0xff]
        %v1370 = vld [vmem:[%s357 + $0x68] sm:$0xff]
        %v1371 = vld [vmem:[%s357 + $0x70] sm:$0xff]
        %v1372 = vld [vmem:[%s357 + $0x78] sm:$0xff]
        %v1373 = vld [vmem:[%s357 + $0x80] sm:$0xff]
        %v1374 = vld [vmem:[%s357 + $0x88] sm:$0xff]
        %v1375 = vld [vmem:[%s357 + $0x90] sm:$0xff]
        %v1376 = vld [vmem:[%s357 + $0x98] sm:$0xff]
        %v1377 = vld [vmem:[%s357 + $0xa0] sm:$0xff]
        %v1378 = vld [vmem:[%s357 + $0xa8] sm:$0xff]
        %v1379 = vld [vmem:[%s357 + $0xb0] sm:$0xff]
        %v1380 = vld [vmem:[%s357 + $0xb8] sm:$0xff]
        %v1381 = vld [vmem:[%s357 + $0xc0] sm:$0xff]
        %v1382 = vld [vmem:[%s357 + $0xc8] sm:$0xff]
        %v1383 = vld [vmem:[%s357 + $0xd0] sm:$0xff]
        %v1384 = vld [vmem:[%s357 + $0xd8] sm:$0xff]
        %v1385 = vld [vmem:[%s357 + $0xe0] sm:$0xff]
        %v1386 = vld [vmem:[%s357 + $0xe8] sm:$0xff]
        %v1387 = vld [vmem:[%s357 + $0xf0] sm:$0xff]
        %v1388 = vld [vmem:[%s357 + $0xf8] sm:$0xff]
        %1389 = vmatprep.subr.mxu0 0.0
        %1390 = vmatpush1.msra.mxu0 %v1372
        %1391 = vmatprep.subr.mxu0 0.0
        %1392 = vmatpush1.msra.mxu0 %v1371
        %1393 = vmatprep.subr.mxu0 0.0
        %1394 = vmatpush1.msra.mxu0 %v1370
        %1395 = vmatprep.subr.mxu0 0.0
        %1396 = vmatpush1.msra.mxu0 %v1369
        %1397 = vmatprep.subr.mxu0 0.0
        %1398 = vmatpush1.msra.mxu0 %v1368
        %1399 = vmatprep.subr.mxu0 0.0
        %1400 = vmatpush1.msra.mxu0 %v1367
        %1401 = vmatprep.subr.mxu0 0.0
        %1402 = vmatpush1.msra.mxu0 %v1366
        %1403 = vmatprep.subr.mxu0 0.0
        %1404 = vmatpush1.msra.mxu0 %v1365
        %1405 = vmatprep.subr.mxu0 0.0
        %1406 = vmatpush1.msra.mxu0 %v1364
        %1407 = vmatprep.subr.mxu0 0.0
        %1408 = vmatpush1.msra.mxu0 %v1363
        %1409 = vmatprep.subr.mxu0 0.0
        %1410 = vmatpush1.msra.mxu0 %v1362
        %1411 = vmatprep.subr.mxu0 0.0
        %1412 = vmatpush1.msra.mxu0 %v1361
        %1413 = vmatprep.subr.mxu0 0.0
        %1414 = vmatpush1.msra.mxu0 %v1360
        %1415 = vmatprep.subr.mxu0 0.0
        %1416 = vmatpush1.msra.mxu0 %v1359
        %1417 = vmatprep.subr.mxu0 0.0
        %1418 = vmatpush1.msra.mxu0 %v1358
        %1419 = vmatprep.subr.mxu0 0.0
        %1420 = vmatpush1.msra.mxu0 %v1357
        %1421 = vmatprep.subr.mxu0 0.0
        %1422 = vmatpush2.msra.mxu0 %v1388
        %1423 = vmatprep.subr.mxu0 0.0
        %1424 = vmatpush2.msra.mxu0 %v1387
        %1425 = vmatprep.subr.mxu0 0.0
        %1426 = vmatpush2.msra.mxu0 %v1386
        %1427 = vmatprep.subr.mxu0 0.0
        %1428 = vmatpush2.msra.mxu0 %v1385
        %1429 = vmatprep.subr.mxu0 0.0
        %1430 = vmatpush2.msra.mxu0 %v1384
        %1431 = vmatprep.subr.mxu0 0.0
        %1432 = vmatpush2.msra.mxu0 %v1383
        %1433 = vmatprep.subr.mxu0 0.0
        %1434 = vmatpush2.msra.mxu0 %v1382
        %1435 = vmatprep.subr.mxu0 0.0
        %1436 = vmatpush2.msra.mxu0 %v1381
        %1437 = vmatprep.subr.mxu0 0.0
        %1438 = vmatpush2.msra.mxu0 %v1380
        %1439 = vmatprep.subr.mxu0 0.0
        %1440 = vmatpush2.msra.mxu0 %v1379
        %1441 = vmatprep.subr.mxu0 0.0
        %1442 = vmatpush2.msra.mxu0 %v1378
        %1443 = vmatprep.subr.mxu0 0.0
        %1444 = vmatpush2.msra.mxu0 %v1377
        %1445 = vmatprep.subr.mxu0 0.0
        %1446 = vmatpush2.msra.mxu0 %v1376
        %1447 = vmatprep.subr.mxu0 0.0
        %1448 = vmatpush2.msra.mxu0 %v1375
        %1449 = vmatprep.subr.mxu0 0.0
        %1450 = vmatpush2.msra.mxu0 %v1374
        %1451 = vmatprep.subr.mxu0 0.0
        %1452 = vmatpush2.msra.mxu0 %v1373
        %1453 = vmatprep.mubr.f32.mxu0 %v1262
        %1454 = vmatmul.mubr.f32.gmra.mxu0 %v1261
        %v1455 = vpop.f32.mrf.mxu0
        %v1456 = vadd.f32 0.0, %v1455
        %v1457 = vpop.f32.mrf.mxu0
        %1458 = vmatprep.mubr.f32.mxu0 %v1264
        %1459 = vmatmul.mubr.f32.gmra.mxu0 %v1263
        %v1460 = vpop.f32.mrf.mxu0
        %v1461 = vadd.f32 0.0, %v1460
        %v1462 = vpop.f32.mrf.mxu0
        %1463 = vmatprep.mubr.f32.mxu0 %v1266
        %1464 = vmatmul.mubr.f32.gmra.mxu0 %v1265
        %v1465 = vpop.f32.mrf.mxu0
        %v1466 = vadd.f32 0.0, %v1465
        %v1467 = vpop.f32.mrf.mxu0
        %1468 = vmatprep.mubr.f32.mxu0 %v1268
        %1469 = vmatmul.mubr.f32.gmra.mxu0 %v1267
        %v1470 = vpop.f32.mrf.mxu0
        %v1471 = vadd.f32 0.0, %v1470
        %v1472 = vpop.f32.mrf.mxu0
        %1473 = vmatprep.mubr.f32.mxu0 %v1270
        %1474 = vmatmul.mubr.f32.gmra.mxu0 %v1269
        %v1475 = vpop.f32.mrf.mxu0
        %v1476 = vadd.f32 0.0, %v1475
        %v1477 = vpop.f32.mrf.mxu0
        %1478 = vmatprep.mubr.f32.mxu0 %v1272
        %1479 = vmatmul.mubr.f32.gmra.mxu0 %v1271
        %v1480 = vpop.f32.mrf.mxu0
        %v1481 = vadd.f32 0.0, %v1480
        %v1482 = vpop.f32.mrf.mxu0
        %1483 = vmatprep.mubr.f32.mxu0 %v1274
        %1484 = vmatmul.mubr.f32.gmra.mxu0 %v1273
        %v1485 = vpop.f32.mrf.mxu0
        %v1486 = vadd.f32 0.0, %v1485
        %v1487 = vpop.f32.mrf.mxu0
        %1488 = vmatprep.mubr.f32.mxu0 %v1276
        %1489 = vmatmul.mubr.f32.gmra.mxu0 %v1275
        %v1490 = vpop.f32.mrf.mxu0
        %v1491 = vadd.f32 0.0, %v1490
        %v1492 = vpop.f32.mrf.mxu0
        %1493 = vmatprep.mubr.f32.mxu0 %v1278
        %1494 = vmatmul.mubr.f32.gmra.mxu0 %v1277
        %v1495 = vpop.f32.mrf.mxu0
        %v1496 = vadd.f32 0.0, %v1495
        %v1497 = vpop.f32.mrf.mxu0
        %1498 = vmatprep.mubr.f32.mxu0 %v1280
        %1499 = vmatmul.mubr.f32.gmra.mxu0 %v1279
        %v1500 = vpop.f32.mrf.mxu0
        %v1501 = vadd.f32 0.0, %v1500
        %v1502 = vpop.f32.mrf.mxu0
        %1503 = vmatprep.mubr.f32.mxu0 %v1282
        %1504 = vmatmul.mubr.f32.gmra.mxu0 %v1281
        %v1505 = vpop.f32.mrf.mxu0
        %v1506 = vadd.f32 0.0, %v1505
        %v1507 = vpop.f32.mrf.mxu0
        %1508 = vmatprep.mubr.f32.mxu0 %v1284
        %1509 = vmatmul.mubr.f32.gmra.mxu0 %v1283
        %v1510 = vpop.f32.mrf.mxu0
        %v1511 = vadd.f32 0.0, %v1510
        %v1512 = vpop.f32.mrf.mxu0
        %1513 = vmatprep.mubr.f32.mxu0 %v1286
        %1514 = vmatmul.mubr.f32.gmra.mxu0 %v1285
        %v1515 = vpop.f32.mrf.mxu0
        %v1516 = vadd.f32 0.0, %v1515
        %v1517 = vpop.f32.mrf.mxu0
        %1518 = vmatprep.mubr.f32.mxu0 %v1288
        %1519 = vmatmul.mubr.f32.gmra.mxu0 %v1287
        %v1520 = vpop.f32.mrf.mxu0
        %v1521 = vadd.f32 0.0, %v1520
        %v1522 = vpop.f32.mrf.mxu0
        %1523 = vmatprep.mubr.f32.mxu0 %v1290
        %1524 = vmatmul.mubr.f32.gmra.mxu0 %v1289
        %v1525 = vpop.f32.mrf.mxu0
        %v1526 = vadd.f32 0.0, %v1525
        %v1527 = vpop.f32.mrf.mxu0
        %1528 = vmatprep.mubr.f32.mxu0 %v1292
        %1529 = vmatmul.mubr.f32.gmra.mxu0 %v1291
        %v1530 = vpop.f32.mrf.mxu0
        %v1531 = vadd.f32 0.0, %v1530
        %v1532 = vpop.f32.mrf.mxu0
        %1533 = vmatprep.mubr.f32.mxu0 %v1294
        %1534 = vmatmul.mubr.f32.gmra.mxu0 %v1293
        %v1535 = vpop.f32.mrf.mxu0
        %v1536 = vadd.f32 0.0, %v1535
        %v1537 = vpop.f32.mrf.mxu0
        %1538 = vmatprep.mubr.f32.mxu0 %v1296
        %1539 = vmatmul.mubr.f32.gmra.mxu0 %v1295
        %v1540 = vpop.f32.mrf.mxu0
        %v1541 = vadd.f32 0.0, %v1540
        %v1542 = vpop.f32.mrf.mxu0
        %1543 = vmatprep.mubr.f32.mxu0 %v1298
        %1544 = vmatmul.mubr.f32.gmra.mxu0 %v1297
        %v1545 = vpop.f32.mrf.mxu0
        %v1546 = vadd.f32 0.0, %v1545
        %v1547 = vpop.f32.mrf.mxu0
        %1548 = vmatprep.mubr.f32.mxu0 %v1300
        %1549 = vmatmul.mubr.f32.gmra.mxu0 %v1299
        %v1550 = vpop.f32.mrf.mxu0
        %v1551 = vadd.f32 0.0, %v1550
        %v1552 = vpop.f32.mrf.mxu0
        %1553 = vmatprep.mubr.f32.mxu0 %v1302
        %1554 = vmatmul.mubr.f32.gmra.mxu0 %v1301
        %v1555 = vpop.f32.mrf.mxu0
        %v1556 = vadd.f32 0.0, %v1555
        %v1557 = vpop.f32.mrf.mxu0
        %1558 = vmatprep.mubr.f32.mxu0 %v1304
        %1559 = vmatmul.mubr.f32.gmra.mxu0 %v1303
        %v1560 = vpop.f32.mrf.mxu0
        %v1561 = vadd.f32 0.0, %v1560
        %v1562 = vpop.f32.mrf.mxu0
        %1563 = vmatprep.mubr.f32.mxu0 %v1306
        %1564 = vmatmul.mubr.f32.gmra.mxu0 %v1305
        %v1565 = vpop.f32.mrf.mxu0
        %v1566 = vadd.f32 0.0, %v1565
        %v1567 = vpop.f32.mrf.mxu0
        %1568 = vmatprep.mubr.f32.mxu0 %v1308
        %1569 = vmatmul.mubr.f32.gmra.mxu0 %v1307
        %v1570 = vpop.f32.mrf.mxu0
        %v1571 = vadd.f32 0.0, %v1570
        %v1572 = vpop.f32.mrf.mxu0
        %1573 = vmatprep.mubr.f32.mxu0 %v1310
        %1574 = vmatmul.mubr.f32.gmra.mxu0 %v1309
        %v1575 = vpop.f32.mrf.mxu0
        %v1576 = vadd.f32 0.0, %v1575
        %v1577 = vpop.f32.mrf.mxu0
        %1578 = vmatprep.mubr.f32.mxu0 %v1312
        %1579 = vmatmul.mubr.f32.gmra.mxu0 %v1311
        %v1580 = vpop.f32.mrf.mxu0
        %v1581 = vadd.f32 0.0, %v1580
        %v1582 = vpop.f32.mrf.mxu0
        %1583 = vmatprep.mubr.f32.mxu0 %v1314
        %1584 = vmatmul.mubr.f32.gmra.mxu0 %v1313
        %v1585 = vpop.f32.mrf.mxu0
        %v1586 = vadd.f32 0.0, %v1585
        %v1587 = vpop.f32.mrf.mxu0
        %1588 = vmatprep.mubr.f32.mxu0 %v1316
        %1589 = vmatmul.mubr.f32.gmra.mxu0 %v1315
        %v1590 = vpop.f32.mrf.mxu0
        %v1591 = vadd.f32 0.0, %v1590
        %v1592 = vpop.f32.mrf.mxu0
        %1593 = vmatprep.mubr.f32.mxu0 %v1318
        %1594 = vmatmul.mubr.f32.gmra.mxu0 %v1317
        %v1595 = vpop.f32.mrf.mxu0
        %v1596 = vadd.f32 0.0, %v1595
        %v1597 = vpop.f32.mrf.mxu0
        %1598 = vmatprep.mubr.f32.mxu0 %v1320
        %1599 = vmatmul.mubr.f32.gmra.mxu0 %v1319
        %v1600 = vpop.f32.mrf.mxu0
        %v1601 = vadd.f32 0.0, %v1600
        %v1602 = vpop.f32.mrf.mxu0
        %1603 = vmatprep.mubr.f32.mxu0 %v1322
        %1604 = vmatmul.mubr.f32.gmra.mxu0 %v1321
        %v1605 = vpop.f32.mrf.mxu0
        %v1606 = vadd.f32 0.0, %v1605
        %v1607 = vpop.f32.mrf.mxu0
        %1608 = vmatprep.mubr.f32.mxu0 %v1324
        %1609 = vmatmul.mubr.f32.gmra.mxu0 %v1323
        %v1610 = vpop.f32.mrf.mxu0
        %v1611 = vadd.f32 0.0, %v1610
        %v1612 = vpop.f32.mrf.mxu0
        %1613 = vdwg.mxu0
        %v1614 = vadd.f32 %v1325, %v1456
        %v1615 = vadd.f32 %v1326, %v1461
        %v1616 = vadd.f32 %v1327, %v1466
        %v1617 = vadd.f32 %v1328, %v1471
        %v1618 = vadd.f32 %v1329, %v1476
        %v1619 = vadd.f32 %v1330, %v1481
        %v1620 = vadd.f32 %v1331, %v1486
        %v1621 = vadd.f32 %v1332, %v1491
        %v1622 = vadd.f32 %v1333, %v1496
        %v1623 = vadd.f32 %v1334, %v1501
        %v1624 = vadd.f32 %v1335, %v1506
        %v1625 = vadd.f32 %v1336, %v1511
        %v1626 = vadd.f32 %v1337, %v1516
        %v1627 = vadd.f32 %v1338, %v1521
        %v1628 = vadd.f32 %v1339, %v1526
        %v1629 = vadd.f32 %v1340, %v1531
        %v1630 = vadd.f32 %v1341, %v1536
        %v1631 = vadd.f32 %v1342, %v1541
        %v1632 = vadd.f32 %v1343, %v1546
        %v1633 = vadd.f32 %v1344, %v1551
        %v1634 = vadd.f32 %v1345, %v1556
        %v1635 = vadd.f32 %v1346, %v1561
        %v1636 = vadd.f32 %v1347, %v1566
        %v1637 = vadd.f32 %v1348, %v1571
        %v1638 = vadd.f32 %v1349, %v1576
        %v1639 = vadd.f32 %v1350, %v1581
        %v1640 = vadd.f32 %v1351, %v1586
        %v1641 = vadd.f32 %v1352, %v1591
        %v1642 = vadd.f32 %v1353, %v1596
        %v1643 = vadd.f32 %v1354, %v1601
        %v1644 = vadd.f32 %v1355, %v1606
        %v1645 = vadd.f32 %v1356, %v1611
        %1646 = vst [vmem:[#allocation2] sm:$0xff] %v1614
        %1647 = vst [vmem:[#allocation2 + $0x8] sm:$0xff] %v1615
        %1648 = vst [vmem:[#allocation2 + $0x10] sm:$0xff] %v1616
        %1649 = vst [vmem:[#allocation2 + $0x18] sm:$0xff] %v1617
        %1650 = vst [vmem:[#allocation2 + $0x20] sm:$0xff] %v1618
        %1651 = vst [vmem:[#allocation2 + $0x28] sm:$0xff] %v1619
        %1652 = vst [vmem:[#allocation2 + $0x30] sm:$0xff] %v1620
        %1653 = vst [vmem:[#allocation2 + $0x38] sm:$0xff] %v1621
        %1654 = vst [vmem:[#allocation2 + $0x40] sm:$0xff] %v1622
        %1655 = vst [vmem:[#allocation2 + $0x48] sm:$0xff] %v1623
        %1656 = vst [vmem:[#allocation2 + $0x50] sm:$0xff] %v1624
        %1657 = vst [vmem:[#allocation2 + $0x58] sm:$0xff] %v1625
        %1658 = vst [vmem:[#allocation2 + $0x60] sm:$0xff] %v1626
        %1659 = vst [vmem:[#allocation2 + $0x68] sm:$0xff] %v1627
        %1660 = vst [vmem:[#allocation2 + $0x70] sm:$0xff] %v1628
        %1661 = vst [vmem:[#allocation2 + $0x78] sm:$0xff] %v1629
        %1662 = vst [vmem:[#allocation2 + $0x80] sm:$0xff] %v1630
        %1663 = vst [vmem:[#allocation2 + $0x88] sm:$0xff] %v1631
        %1664 = vst [vmem:[#allocation2 + $0x90] sm:$0xff] %v1632
        %1665 = vst [vmem:[#allocation2 + $0x98] sm:$0xff] %v1633
        %1666 = vst [vmem:[#allocation2 + $0xa0] sm:$0xff] %v1634
        %1667 = vst [vmem:[#allocation2 + $0xa8] sm:$0xff] %v1635
        %1668 = vst [vmem:[#allocation2 + $0xb0] sm:$0xff] %v1636
        %1669 = vst [vmem:[#allocation2 + $0xb8] sm:$0xff] %v1637
        %1670 = vst [vmem:[#allocation2 + $0xc0] sm:$0xff] %v1638
        %1671 = vst [vmem:[#allocation2 + $0xc8] sm:$0xff] %v1639
        %1672 = vst [vmem:[#allocation2 + $0xd0] sm:$0xff] %v1640
        %1673 = vst [vmem:[#allocation2 + $0xd8] sm:$0xff] %v1641
        %1674 = vst [vmem:[#allocation2 + $0xe0] sm:$0xff] %v1642
        %1675 = vst [vmem:[#allocation2 + $0xe8] sm:$0xff] %v1643
        %1676 = vst [vmem:[#allocation2 + $0xf0] sm:$0xff] %v1644
        %1677 = vst [vmem:[#allocation2 + $0xf8] sm:$0xff] %v1645
        %p1678 = scmp.eq.s32.totalorder %s21, 1
        // Predicated region
        $region68: #{_siglip_mlp_call.1} parent=58 // pred_check
          %p1679 = pneg %p1678
        $region69: #{_siglip_mlp_call.1} parent=58 // pred_check_branch
          %1681 = sbr.rel (%p1679) target = $region71
        $region70: #{_siglip_mlp_call.1} parent=58 // pred_region
          %v1682 = vld [vmem:[#allocation2] sm:$0xff]
          %v1683 = vld [vmem:[#allocation2 + $0x8] sm:$0xff]
          %v1684 = vld [vmem:[#allocation2 + $0x10] sm:$0xff]
          %v1685 = vld [vmem:[#allocation2 + $0x18] sm:$0xff]
          %v1686 = vld [vmem:[#allocation2 + $0x20] sm:$0xff]
          %v1687 = vld [vmem:[#allocation2 + $0x28] sm:$0xff]
          %v1688 = vld [vmem:[#allocation2 + $0x30] sm:$0xff]
          %v1689 = vld [vmem:[#allocation2 + $0x38] sm:$0xff]
          %v1690 = vld [vmem:[#allocation2 + $0x40] sm:$0xff]
          %v1691 = vld [vmem:[#allocation2 + $0x48] sm:$0xff]
          %v1692 = vld [vmem:[#allocation2 + $0x50] sm:$0xff]
          %v1693 = vld [vmem:[#allocation2 + $0x58] sm:$0xff]
          %v1694 = vld [vmem:[#allocation2 + $0x60] sm:$0xff]
          %v1695 = vld [vmem:[#allocation2 + $0x68] sm:$0xff]
          %v1696 = vld [vmem:[#allocation2 + $0x70] sm:$0xff]
          %v1697 = vld [vmem:[#allocation2 + $0x78] sm:$0xff]
          %v1698 = vld [vmem:[#allocation2 + $0x80] sm:$0xff]
          %v1699 = vld [vmem:[#allocation2 + $0x88] sm:$0xff]
          %v1700 = vld [vmem:[#allocation2 + $0x90] sm:$0xff]
          %v1701 = vld [vmem:[#allocation2 + $0x98] sm:$0xff]
          %v1702 = vld [vmem:[#allocation2 + $0xa0] sm:$0xff]
          %v1703 = vld [vmem:[#allocation2 + $0xa8] sm:$0xff]
          %v1704 = vld [vmem:[#allocation2 + $0xb0] sm:$0xff]
          %v1705 = vld [vmem:[#allocation2 + $0xb8] sm:$0xff]
          %v1706 = vld [vmem:[#allocation2 + $0xc0] sm:$0xff]
          %v1707 = vld [vmem:[#allocation2 + $0xc8] sm:$0xff]
          %v1708 = vld [vmem:[#allocation2 + $0xd0] sm:$0xff]
          %v1709 = vld [vmem:[#allocation2 + $0xd8] sm:$0xff]
          %v1710 = vld [vmem:[#allocation2 + $0xe0] sm:$0xff]
          %v1711 = vld [vmem:[#allocation2 + $0xe8] sm:$0xff]
          %v1712 = vld [vmem:[#allocation2 + $0xf0] sm:$0xff]
          %v1713 = vld [vmem:[#allocation2 + $0xf8] sm:$0xff]
          %1714 = vst [vmem:[%s363] sm:$0xff] %v1682
          %1715 = vst [vmem:[%s363 + $0x8] sm:$0xff] %v1683
          %1716 = vst [vmem:[%s363 + $0x10] sm:$0xff] %v1684
          %1717 = vst [vmem:[%s363 + $0x18] sm:$0xff] %v1685
          %1718 = vst [vmem:[%s363 + $0x20] sm:$0xff] %v1686
          %1719 = vst [vmem:[%s363 + $0x28] sm:$0xff] %v1687
          %1720 = vst [vmem:[%s363 + $0x30] sm:$0xff] %v1688
          %1721 = vst [vmem:[%s363 + $0x38] sm:$0xff] %v1689
          %1722 = vst [vmem:[%s363 + $0x40] sm:$0xff] %v1690
          %1723 = vst [vmem:[%s363 + $0x48] sm:$0xff] %v1691
          %1724 = vst [vmem:[%s363 + $0x50] sm:$0xff] %v1692
          %1725 = vst [vmem:[%s363 + $0x58] sm:$0xff] %v1693
          %1726 = vst [vmem:[%s363 + $0x60] sm:$0xff] %v1694
          %1727 = vst [vmem:[%s363 + $0x68] sm:$0xff] %v1695
          %1728 = vst [vmem:[%s363 + $0x70] sm:$0xff] %v1696
          %1729 = vst [vmem:[%s363 + $0x78] sm:$0xff] %v1697
          %1730 = vst [vmem:[%s363 + $0x80] sm:$0xff] %v1698
          %1731 = vst [vmem:[%s363 + $0x88] sm:$0xff] %v1699
          %1732 = vst [vmem:[%s363 + $0x90] sm:$0xff] %v1700
          %1733 = vst [vmem:[%s363 + $0x98] sm:$0xff] %v1701
          %1734 = vst [vmem:[%s363 + $0xa0] sm:$0xff] %v1702
          %1735 = vst [vmem:[%s363 + $0xa8] sm:$0xff] %v1703
          %1736 = vst [vmem:[%s363 + $0xb0] sm:$0xff] %v1704
          %1737 = vst [vmem:[%s363 + $0xb8] sm:$0xff] %v1705
          %1738 = vst [vmem:[%s363 + $0xc0] sm:$0xff] %v1706
          %1739 = vst [vmem:[%s363 + $0xc8] sm:$0xff] %v1707
          %1740 = vst [vmem:[%s363 + $0xd0] sm:$0xff] %v1708
          %1741 = vst [vmem:[%s363 + $0xd8] sm:$0xff] %v1709
          %1742 = vst [vmem:[%s363 + $0xe0] sm:$0xff] %v1710
          %1743 = vst [vmem:[%s363 + $0xe8] sm:$0xff] %v1711
          %1744 = vst [vmem:[%s363 + $0xf0] sm:$0xff] %v1712
          %1745 = vst [vmem:[%s363 + $0xf8] sm:$0xff] %v1713
        $region71: #{_siglip_mlp_call.1} parent=58 // pred_fallthru
          _
        %s1746 = smul.u32 32, %s20
        %p1747 = scmp.lt.s32.totalorder %s1746, 63
        %s1748 = scalar_select %p1747, %s1746, 63
        %s1749 = smul.addr %s1748, 8
        %s1750 = scalar_lea.vmem %s5, %s1749
        // Predicated region
        $region72: #{_siglip_mlp_call.1} parent=58 // pred_check
          %p1751 = pneg %p166
        $region73: #{_siglip_mlp_call.1} parent=58 // pred_check_branch
          %1753 = sbr.rel (%p1751) target = $region75
        $region74: #{_siglip_mlp_call.1} parent=58 // pred_region
          %s1754 = smul.u32 32, %s20
        $region75: #{_siglip_mlp_call.1} parent=58 // pred_fallthru
          _
      $region59: #{_siglip_mlp_call.1} parent=5 // pred_fallthru
        _
      %p1755 = scmp.le.s32.totalorder 2, %s11
      // Predicated region
      $region76: #{_siglip_mlp_call.1} parent=5 // pred_check
        %p1756 = pneg %p1755
      $region77: #{_siglip_mlp_call.1} parent=5 // pred_check_branch
        %1758 = sbr.rel (%p1756) target = $region79
      $region78: #{_siglip_mlp_call.1} parent=5 // pred_region
        %s1759 = ssub.s32 %s11, 2
        // Predicated region
        $region80: #{_siglip_mlp_call.1} parent=78 // pred_check
          %p1760 = pneg %p172
        $region81: #{_siglip_mlp_call.1} parent=78 // pred_check_branch
          %1762 = sbr.rel (%p1760) target = $region83
        $region82: #{_siglip_mlp_call.1} parent=78 // pred_region
          %s1763 = smul.u32 32, %s22
          %p1764 = scmp.lt.s32.totalorder %s1763, 63
          %s1765 = scalar_select %p1764, %s1763, 63
          %s1766 = smul.addr %s1765, 8
          %s1767 = scalar_lea.vmem %s5, %s1766
        $region83: #{_siglip_mlp_call.1} parent=78 // pred_fallthru
          _
      $region79: #{_siglip_mlp_call.1} parent=5 // pred_fallthru
        _
    $region6: #{_siglip_mlp_call.1} parent=1 // loop_footer
      %s15 = sadd.s32 1, %s11
    $region7: #{_siglip_mlp_call.1} parent=1 // loop_footer_branch
      %10 = sbr.rel target = $region3
    $region8: #{_siglip_mlp_call.1} parent=1 // loop_exit
      _

</llo_original>
